<compile_context>
chip_gen: v7x
topology: tpu7x:2x2x1
jax: 0.10.0
libtpu: 0.0.40
codegen_flags: <defaults>
</compile_context>

<pallas_src>
import jax
import jax.numpy as jnp
from jax import lax
from jax.experimental import pallas as pl
from jax.experimental.pallas import tpu as pltpu


def _round_up(x, m):
    return -(-x // m) * m


# ---------------------------------------------------------------------------
# Pallas kernel: fused (im2col-matmul conv) + bias + capsule squash
# ---------------------------------------------------------------------------
def primary_caps_kernel(p_ref, w_ref, b_ref, g_ref, o_ref):
    # conv as matmul on the MXU: bf16 x bf16 -> f32 accumulator
    y = jnp.dot(p_ref[...], w_ref[...], preferred_element_type=jnp.float32)
    y = y + b_ref[...]                                   # broadcast bias (1, NB)
    # per-capsule-group squared norm broadcast back to every column of its
    # group via a 0/1 block-diagonal matrix (small MXU matmul; avoids any
    # in-kernel reshape / cross-lane reduction)
    sq = jnp.dot(y * y, g_ref[...], preferred_element_type=jnp.float32)
    # squash(v) = ||v||^2 v / ((1+||v||^2)||v||)  ==  v * ||v|| / (1+||v||^2)
    # (NaN-free at v = 0; reciprocal goes to the EUP slot, essentially free)
    o_ref[...] = (y * jnp.sqrt(sq)
                  * pl.reciprocal(1.0 + sq, approx=True)).astype(o_ref.dtype)


def primary_caps_pallas(x_nchw, w_all, b_all, *, kernel_size=9, stride=2,
                        tile_rows=128):
    """x_nchw: (N, C, H, W); w_all: (caps, out_ch, C, kh, kw); b_all: (caps, out_ch)."""
    N, C, H, W = x_nchw.shape
    num_caps, out_ch = w_all.shape[0], w_all.shape[1]
    Ho = (H - kernel_size) // stride + 1
    Wo = (W - kernel_size) // stride + 1
    K = C * kernel_size * kernel_size
    NC = out_ch * num_caps
    M = N * Ho * Wo

    # lane-dense output packing: `pack` logical rows per stored row so the
    # stored width is >= 128 lanes (unmasked vst) instead of NC.
    pack = 128 // NC if (NC < 128 and 128 % NC == 0) else 1

    Kp = _round_up(K, 128)          # aligned lane dim for patches / weight rows
    KB = pack * Kp                  # packed LHS width
    NB = pack * NC                  # packed output width (>= 128 when pack > 1)

    # Row tiling in the *packed* domain.  Keep the sublane dim a multiple of 16
    # (bf16 tile), prefer big tiles to amortize ~0.35us/step pipeline overhead,
    # but keep >= 2 parallel grid steps when possible (v7x has 2 TensorCores).
    R = -(-M // pack)                                   # packed payload rows
    tr = max(16, (min(tile_rows, R) // 16) * 16)
    if -(-R // tr) == 1 and R > 16:
        tr = _round_up(-(-R // 2), 16)
    Rp = _round_up(R, tr)                               # padded packed rows
    Mp = Rp * pack                                      # padded logical rows
    grid = (Rp // tr,)

    # ---- glue: im2col (NCHW -> (M, K) patches, inner order (ki, kj, c)) ----
    # TODO(synk): at real CapsNet scale, fuse patch extraction into the kernel
    # (windowed BlockSpecs / manual DMAs over x_nhwc); the 81x im2col expansion
    # materialized here in HBM is the dominant cost for large inputs.
    x_nhwc = jnp.transpose(x_nchw, (0, 2, 3, 1))
    taps = []
    for i in range(kernel_size):
        for j in range(kernel_size):
            taps.append(
                x_nhwc[:, i:i + stride * Ho:stride, j:j + stride * Wo:stride, :])
    patches = jnp.stack(taps, axis=3).reshape(M, K)                   # (M, K)
    patches = jnp.pad(patches, ((0, Mp - M), (0, Kp - K)))
    patches = patches.astype(jnp.bfloat16).reshape(Rp, KB)            # packed

    # ---- glue: pack all capsule conv weights into one matmul weight --------
    # (caps, out_ch, C, kh, kw) -> (kh, kw, C, out_ch, caps) -> (K, NC), then
    # zero-pad K and replicate block-diagonally `pack` times so each packed
    # LHS row segment hits its own weight copy (zero blocks are MXU-free).
    w_mat = jnp.transpose(w_all, (3, 4, 2, 1, 0)).reshape(K, NC)
    w_mat = jnp.pad(w_mat, ((0, Kp - K), (0, 0)))
    w_big = jnp.kron(jnp.eye(pack, dtype=w_mat.dtype), w_mat).astype(jnp.bfloat16)
    b_big = jnp.tile(jnp.transpose(b_all, (1, 0)).reshape(1, NC),
                     (1, pack)).astype(jnp.float32)
    # 0/1 block-diagonal group-sum matrix: ones within each capsule group
    g_big = jnp.kron(jnp.eye(pack * out_ch, dtype=jnp.float32),
                     jnp.ones((num_caps, num_caps), dtype=jnp.float32))

    def run(single_buffer_consts):
        def const_spec(shape):
            kwargs = {}
            if single_buffer_consts:
                # grid-invariant operands never need re-DMA -> single-buffer
                kwargs["pipeline_mode"] = pl.Buffered(1)
            return pl.BlockSpec(shape, lambda i: (0, 0), **kwargs)

        return pl.pallas_call(
            primary_caps_kernel,
            out_shape=jax.ShapeDtypeStruct((Rp, NB), jnp.float32),
            grid_spec=pltpu.PrefetchScalarGridSpec(
                num_scalar_prefetch=0,
                grid=grid,
                in_specs=[
                    pl.BlockSpec((tr, KB), lambda i: (i, 0)),  # packed patches
                    const_spec((KB, NB)),                      # fused conv weight
                    const_spec((1, NB)),                       # fused bias
                    const_spec((NB, NB)),                      # group-sum matrix
                ],
                out_specs=pl.BlockSpec((tr, NB), lambda i: (i, 0)),
            ),
            compiler_params=pltpu.CompilerParams(
                dimension_semantics=("parallel",)),
            # TODO(synk): at real CapsNet shapes (C=256 -> K~20k, NC=256) add a
            # trailing 'arbitrary' K grid axis with an f32 VMEM accumulator and
            # pl.when init/finalize so the weight block stays inside scoped
            # VMEM (critical on v7x's 64 MiB VMEM).
        )(patches, w_big, b_big, g_big)

    try:
        out_packed = jax.block_until_ready(run(True))
    except Exception:  # pl.Buffered(1) unsupported -> default double buffering
        out_packed = jax.block_until_ready(run(False))

    # unpack lane-dense rows (row-major, same bytes -> free) and drop pad rows
    out_cols = out_packed.reshape(Mp, NC)[:M]

    # ---- glue: rearrange to PyTorch's (N, out_ch*Ho*Wo, num_caps) ----------
    out = out_cols.reshape(N, Ho, Wo, out_ch, num_caps)
    out = jnp.transpose(out, (0, 3, 1, 2, 4))            # (N, oc, Ho, Wo, caps)
    return out.reshape(N, out_ch * Ho * Wo, num_caps)


# ---------------------------------------------------------------------------
# Pure-JAX reference (mirrors the PyTorch forward exactly)
# ---------------------------------------------------------------------------
def squash_ref(x, axis=-1):
    sq = jnp.sum(x ** 2, axis=axis, keepdims=True)
    return sq * x / ((1.0 + sq) * jnp.sqrt(sq))


def primary_caps_ref(x_nchw, w_all, b_all, *, stride=2):
    num_caps = w_all.shape[0]
    outs = []
    for cap in range(num_caps):
        y = lax.conv_general_dilated(
            x_nchw, w_all[cap], window_strides=(stride, stride), padding="VALID",
            dimension_numbers=("NCHW", "OIHW", "NCHW"))
        y = y + b_all[cap][None, :, None, None]
        outs.append(y)
    out = jnp.stack(outs, axis=1)                        # (N, caps, oc, Ho, Wo)
    out = out.reshape(x_nchw.shape[0], num_caps, -1)
    out = jnp.transpose(out, (0, 2, 1))
    return squash_ref(out, axis=-1)


# ---------------------------------------------------------------------------
if __name__ == "__main__":
    # One Conv2d(in=4, out=8, k=9, s=2) per capsule, num_capsules=4.
    # 16x16 input -> 4x4 output grid; batch=8 gives the kernel 2 parallel
    # row tiles (so both v7x TensorCores get work).
    N, C, H, W = 8, 4, 16, 16
    out_ch, num_caps, ksize, stride = 8, 4, 9, 2

    key = jax.random.PRNGKey(0)
    k_x, k_w, k_b = jax.random.split(key, 3)
    x = jax.random.normal(k_x, (N, C, H, W), dtype=jnp.float32)
    w_all = 0.05 * jax.random.normal(
        k_w, (num_caps, out_ch, C, ksize, ksize), dtype=jnp.float32)
    b_all = 0.05 * jax.random.normal(k_b, (num_caps, out_ch), dtype=jnp.float32)

    out = primary_caps_pallas(x, w_all, b_all, kernel_size=ksize, stride=stride)
    out = jax.block_until_ready(out)

    ref = primary_caps_ref(x, w_all, b_all, stride=stride)
    assert out.shape == ref.shape == (N, out_ch * 4 * 4, num_caps), out.shape
    # bf16 MXU operands (f32 accumulation) + approx EUP reciprocal -> compare
    # against the pure-f32 reference with a correspondingly looser tolerance.
    max_err = float(jnp.max(jnp.abs(out - ref)))
    assert jnp.allclose(out, ref, atol=3e-2, rtol=3e-2), max_err

    print("KERNEL_OK")
</pallas_src>

<mosaic_0001>
module attributes {stable_mosaic.version = 11 : i64} {
  func.func @primary_caps_kernel(%arg0: i32, %arg1: memref<16x1536xbf16, #tpu.memory_space<vmem>>, %arg2: memref<1536x128xbf16, #tpu.memory_space<vmem>>, %arg3: memref<1x128xf32, #tpu.memory_space<vmem>>, %arg4: memref<128x128xf32, #tpu.memory_space<vmem>>, %arg5: memref<16x128xf32, #tpu.memory_space<vmem>>) attributes {dimension_semantics = [#tpu.dimension_semantics<parallel>], iteration_bounds = array<i64: 2>, scalar_prefetch = 0 : i64, scratch_operands = 0 : i64, tpu.core_type = #tpu.core_type<tc>, window_params = [{transform_indices = @transform_0, window_bounds = array<i64: 16, 1536>}, {pipeline_mode = #tpu.pipeline_mode<synchronous>, transform_indices = @transform_1, window_bounds = array<i64: 1536, 128>}, {pipeline_mode = #tpu.pipeline_mode<synchronous>, transform_indices = @transform_2, window_bounds = array<i64: 1, 128>}, {pipeline_mode = #tpu.pipeline_mode<synchronous>, transform_indices = @transform_3, window_bounds = array<i64: 128, 128>}, {transform_indices = @transform_4, window_bounds = array<i64: 16, 128>}]} {
    %c0 = arith.constant 0 : index
    %c0_0 = arith.constant 0 : index
    %0 = vector.load %arg1[%c0, %c0_0] : memref<16x1536xbf16, #tpu.memory_space<vmem>>, vector<16x1536xbf16>
    %c0_1 = arith.constant 0 : index
    %c0_2 = arith.constant 0 : index
    %1 = vector.load %arg2[%c0_1, %c0_2] : memref<1536x128xbf16, #tpu.memory_space<vmem>>, vector<1536x128xbf16>
    %cst = arith.constant dense<0.000000e+00> : vector<16x128xf32>
    %2 = tpu.matmul %0, %1, %cst {dimension_numbers = #tpu.dot_dimension_numbers<[1], [0], [0], [1], [0, 0, 1, 1], [], []>} : vector<16x1536xbf16>, vector<1536x128xbf16>, vector<16x128xf32> -> vector<16x128xf32>
    %c0_3 = arith.constant 0 : index
    %c0_4 = arith.constant 0 : index
    %3 = vector.load %arg3[%c0_3, %c0_4] : memref<1x128xf32, #tpu.memory_space<vmem>>, vector<1x128xf32>
    %4 = vector.broadcast %3 : vector<1x128xf32> to vector<16x128xf32>
    %5 = arith.addf %2, %4 : vector<16x128xf32>
    %6 = arith.mulf %5, %5 : vector<16x128xf32>
    %c0_5 = arith.constant 0 : index
    %c0_6 = arith.constant 0 : index
    %7 = vector.load %arg4[%c0_5, %c0_6] : memref<128x128xf32, #tpu.memory_space<vmem>>, vector<128x128xf32>
    %cst_7 = arith.constant dense<0.000000e+00> : vector<16x128xf32>
    %8 = tpu.matmul %6, %7, %cst_7 {dimension_numbers = #tpu.dot_dimension_numbers<[1], [0], [0], [1], [0, 0, 1, 1], [], []>} : vector<16x128xf32>, vector<128x128xf32>, vector<16x128xf32> -> vector<16x128xf32>
    %9 = math.sqrt %8 : vector<16x128xf32>
    %10 = arith.mulf %5, %9 : vector<16x128xf32>
    %cst_8 = arith.constant 1.000000e+00 : f32
    %11 = vector.broadcast %cst_8 : f32 to vector<16x128xf32>
    %12 = arith.addf %11, %8 : vector<16x128xf32>
    %13 = tpu.reciprocal %12 {approx = true} : vector<16x128xf32> -> vector<16x128xf32>
    %14 = arith.mulf %10, %13 : vector<16x128xf32>
    %c0_9 = arith.constant 0 : index
    %c0_10 = arith.constant 0 : index
    %15 = vector.load %arg5[%c0_9, %c0_10] : memref<16x128xf32, #tpu.memory_space<vmem>>, vector<16x128xf32>
    tpu.vector_store %arg5[%c0_9, %c0_10], %14 {strides = array<i32>} : memref<16x128xf32, #tpu.memory_space<vmem>>, vector<16x128xf32>,
    return
  }
  func.func @transform_0(%arg0: i32) -> (i32, i32) {
    %c0_i32 = arith.constant 0 : i32
    %c0_i32_0 = arith.constant 0 : i32
    return %arg0, %c0_i32 : i32, i32
  }
  func.func @transform_1(%arg0: i32) -> (i32, i32) {
    %c0_i32 = arith.constant 0 : i32
    %c0_i32_0 = arith.constant 0 : i32
    %c0_i32_1 = arith.constant 0 : i32
    return %c0_i32, %c0_i32_0 : i32, i32
  }
  func.func @transform_2(%arg0: i32) -> (i32, i32) {
    %c0_i32 = arith.constant 0 : i32
    %c0_i32_0 = arith.constant 0 : i32
    %c0_i32_1 = arith.constant 0 : i32
    return %c0_i32, %c0_i32_0 : i32, i32
  }
  func.func @transform_3(%arg0: i32) -> (i32, i32) {
    %c0_i32 = arith.constant 0 : i32
    %c0_i32_0 = arith.constant 0 : i32
    %c0_i32_1 = arith.constant 0 : i32
    return %c0_i32, %c0_i32_0 : i32, i32
  }
  func.func @transform_4(%arg0: i32) -> (i32, i32) {
    %c0_i32 = arith.constant 0 : i32
    %c0_i32_0 = arith.constant 0 : i32
    return %arg0, %c0_i32 : i32, i32
  }
}

module attributes {stable_mosaic.version = 11 : i64} {
  func.func @primary_caps_kernel(%arg0: i32, %arg1: memref<16x1536xbf16, #tpu.memory_space<vmem>>, %arg2: memref<1536x128xbf16, #tpu.memory_space<vmem>>, %arg3: memref<1x128xf32, #tpu.memory_space<vmem>>, %arg4: memref<128x128xf32, #tpu.memory_space<vmem>>, %arg5: memref<16x128xf32, #tpu.memory_space<vmem>>) attributes {dimension_semantics = [#tpu.dimension_semantics<parallel>], iteration_bounds = array<i64: 2>, scalar_prefetch = 0 : i64, scratch_operands = 0 : i64, tpu.core_type = #tpu.core_type<tc>, window_params = [{transform_indices = @transform_0, window_bounds = array<i64: 16, 1536>}, {pipeline_mode = #tpu.pipeline_mode<synchronous>, transform_indices = @transform_1, window_bounds = array<i64: 1536, 128>}, {pipeline_mode = #tpu.pipeline_mode<synchronous>, transform_indices = @transform_2, window_bounds = array<i64: 1, 128>}, {pipeline_mode = #tpu.pipeline_mode<synchronous>, transform_indices = @transform_3, window_bounds = array<i64: 128, 128>}, {transform_indices = @transform_4, window_bounds = array<i64: 16, 128>}]} {
    %c0 = arith.constant 0 : index
    %c0_0 = arith.constant 0 : index
    %0 = vector.load %arg1[%c0, %c0_0] : memref<16x1536xbf16, #tpu.memory_space<vmem>>, vector<16x1536xbf16>
    %c0_1 = arith.constant 0 : index
    %c0_2 = arith.constant 0 : index
    %1 = vector.load %arg2[%c0_1, %c0_2] : memref<1536x128xbf16, #tpu.memory_space<vmem>>, vector<1536x128xbf16>
    %cst = arith.constant dense<0.000000e+00> : vector<16x128xf32>
    %2 = tpu.matmul %0, %1, %cst {dimension_numbers = #tpu.dot_dimension_numbers<[1], [0], [0], [1], [0, 0, 1, 1], [], []>} : vector<16x1536xbf16>, vector<1536x128xbf16>, vector<16x128xf32> -> vector<16x128xf32>
    %c0_3 = arith.constant 0 : index
    %c0_4 = arith.constant 0 : index
    %3 = vector.load %arg3[%c0_3, %c0_4] : memref<1x128xf32, #tpu.memory_space<vmem>>, vector<1x128xf32>
    %4 = vector.broadcast %3 : vector<1x128xf32> to vector<16x128xf32>
    %5 = arith.addf %2, %4 : vector<16x128xf32>
    %6 = arith.mulf %5, %5 : vector<16x128xf32>
    %c0_5 = arith.constant 0 : index
    %c0_6 = arith.constant 0 : index
    %7 = vector.load %arg4[%c0_5, %c0_6] : memref<128x128xf32, #tpu.memory_space<vmem>>, vector<128x128xf32>
    %cst_7 = arith.constant dense<0.000000e+00> : vector<16x128xf32>
    %8 = tpu.matmul %6, %7, %cst_7 {dimension_numbers = #tpu.dot_dimension_numbers<[1], [0], [0], [1], [0, 0, 1, 1], [], []>} : vector<16x128xf32>, vector<128x128xf32>, vector<16x128xf32> -> vector<16x128xf32>
    %9 = math.sqrt %8 : vector<16x128xf32>
    %10 = arith.mulf %5, %9 : vector<16x128xf32>
    %cst_8 = arith.constant 1.000000e+00 : f32
    %11 = vector.broadcast %cst_8 : f32 to vector<16x128xf32>
    %12 = arith.addf %11, %8 : vector<16x128xf32>
    %13 = tpu.reciprocal %12 {approx = true} : vector<16x128xf32> -> vector<16x128xf32>
    %14 = arith.mulf %10, %13 : vector<16x128xf32>
    %c0_9 = arith.constant 0 : index
    %c0_10 = arith.constant 0 : index
    %15 = vector.load %arg5[%c0_9, %c0_10] : memref<16x128xf32, #tpu.memory_space<vmem>>, vector<16x128xf32>
    tpu.vector_store %arg5[%c0_9, %c0_10], %14 {strides = array<i32>} : memref<16x128xf32, #tpu.memory_space<vmem>>, vector<16x128xf32>,
    return
  }
  func.func @transform_0(%arg0: i32) -> (i32, i32) {
    %c0_i32 = arith.constant 0 : i32
    %c0_i32_0 = arith.constant 0 : i32
    return %arg0, %c0_i32 : i32, i32
  }
  func.func @transform_1(%arg0: i32) -> (i32, i32) {
    %c0_i32 = arith.constant 0 : i32
    %c0_i32_0 = arith.constant 0 : i32
    %c0_i32_1 = arith.constant 0 : i32
    return %c0_i32, %c0_i32_0 : i32, i32
  }
  func.func @transform_2(%arg0: i32) -> (i32, i32) {
    %c0_i32 = arith.constant 0 : i32
    %c0_i32_0 = arith.constant 0 : i32
    %c0_i32_1 = arith.constant 0 : i32
    return %c0_i32, %c0_i32_0 : i32, i32
  }
  func.func @transform_3(%arg0: i32) -> (i32, i32) {
    %c0_i32 = arith.constant 0 : i32
    %c0_i32_0 = arith.constant 0 : i32
    %c0_i32_1 = arith.constant 0 : i32
    return %c0_i32, %c0_i32_0 : i32, i32
  }
  func.func @transform_4(%arg0: i32) -> (i32, i32) {
    %c0_i32 = arith.constant 0 : i32
    %c0_i32_0 = arith.constant 0 : i32
    return %arg0, %c0_i32 : i32, i32
  }
}

</mosaic_0001>

<llo_original>
// kernel: tpu_custom_call.1
$region0: #{tpu_custom_call.1}
  #allocation0 [shape = 'u32[]', space=smem, size = 0x4, offset = 0x4, fixed_abs, tag = 'smem constant byte address 0x4 - core index']
  #allocation1 [shape = 'u32[144,128]{1,0:T(1,128)}', space=vmem, size = 0x12000, scoped, tag = 'internal scratch']
  %s0 = inlined_call_operand.hbm [shape: bf16[32,1536], index: 0, kind: input, shape index: {}]
  %s1 = inlined_call_operand.hbm [shape: bf16[1536,128], index: 1, kind: input, shape index: {}]
  %s2 = inlined_call_operand.vmem [shape: f32[1,128], index: 2, kind: input, shape index: {}]
  %s3 = inlined_call_operand.hbm [shape: f32[128,128], index: 3, kind: input, shape index: {}]
  %s4 = inlined_call_operand.hbm [shape: f32[32,128], index: 4, kind: output, shape index: {}]
  %s5 = sld [smem:[#allocation0]]
  $region61: #{tpu_custom_call.1} parent=0
    _
  %s7 = ssub.s32 1, %s5
  %s8 = scalar_select 0, %s7, %s5
  $region1: #{tpu_custom_call.1} parent=0
    #allocation2 [shape = 'u8[98304]{0}', space=vmem, size = 0x18000, scoped, tag = 'input window, operand 0']
    #allocation3 [shape = 's32[2]{0}', space=sflag, size = 0x8, scoped, tag = 'scoped memory for tpu_custom_call.1']
    #allocation4 [shape = 's32[2]{0}', space=sflag, size = 0x8, scoped, tag = 'scoped memory for tpu_custom_call.1']
    #allocation5 [shape = 'u8[393216]{0}', space=vmem, size = 0x60000, scoped, tag = 'input window, operand 1, single buffered']
    #allocation6 [shape = 's32[1]{0}', space=sflag, size = 0x4, scoped, tag = 'scoped memory for tpu_custom_call.1']
    #allocation7 [shape = 'u8[65536]{0}', space=vmem, size = 0x10000, scoped, tag = 'input window, operand 3, single buffered']
    #allocation8 [shape = 'u8[16384]{0}', space=vmem, size = 0x4000, scoped, tag = 'output window, operand 0']
    %9 = vsyncpa [#allocation3], 0
    %s10 = scalar_lea.sflag [#allocation3], 1
    %11 = vsyncpa %s10, 0
    %12 = vsyncpa [#allocation6], 0
    %13 = vsyncpa [#allocation4], 0
    %s14 = scalar_lea.sflag [#allocation4], 1
    %15 = vsyncpa %s14, 0
    loop: start=0, step=1, limit=4
    $region2: #{tpu_custom_call.1} parent=1 // loop_pre_header
      _
    $region3: #{tpu_custom_call.1} parent=1 // loop_header
      %s17 = sphi 0, %s21
      %p18 = scmp.ge.s32.totalorder %s17, 4
      %s27 = sphi 0, %s29
      %s30 = sphi 0, %s27
      %s31 = sphi 0, %s30
      %s47 = sphi 0, %s31
      %s51 = sphi 0, %s51
      %s53 = sphi 0, %s51
      %s54 = sphi 0, %s53
      %s68 = sphi 0, %s54
      %s72 = sphi 0, %s72
      %s74 = sphi 0, %s72
      %s75 = sphi 0, %s74
      %s89 = sphi 0, %s75
      %s93 = sphi 0, %s93
      %s95 = sphi 0, %s93
      %s96 = sphi 0, %s95
      %s110 = sphi 0, %s96
      %s116 = sphi 0, %s118
      %s119 = sphi 0, %s116
      %s120 = sphi 0, %s119
      %s136 = sphi 0, %s120
    $region4: #{tpu_custom_call.1} parent=1 // loop_header_branch
      %20 = sbr.rel (%p18) target = $region8
    $region5: #{tpu_custom_call.1} parent=1 // loop_body
      %s22 = ssub.s32 %s17, 1
      %s23 = ssub.s32 %s17, 2
      %s24 = sadd.s32 %s17, 1
      %s25 = ssub.s32 %s17, %s24
      %p26 = scmp.eq.s32.totalorder %s25, 0
      %s28 = sadd.s32 %s27, 1
      %s29 = scalar_select %p26, %s27, %s28
      %p32 = pneg %p26
      %p33 = scmp.eq.s32.totalorder %s17, 1
      %p34 = por %p32, %p33
      %p35 = scmp.ne.s32.totalorder %s27, %s30
      %p36 = scmp.eq.s32.totalorder %s17, 0
      %p37 = por %p35, %p36
      %p38 = scmp.ne.s32.totalorder %s27, %s30
      %p39 = scmp.eq.s32.totalorder %s22, 1
      %p40 = por %p38, %p39
      %p41 = scmp.ne.s32.totalorder %s30, %s31
      %p42 = scmp.eq.s32.totalorder %s22, 0
      %p43 = por %p41, %p42
      %p44 = scmp.ne.s32.totalorder %s30, %s31
      %p45 = scmp.eq.s32.totalorder %s23, 1
      %p46 = por %p44, %p45
      %p48 = scmp.ne.s32.totalorder %s31, %s47
      %p49 = scmp.eq.s32.totalorder %s23, 0
      %p50 = por %p48, %p49
      %s52 = sadd.s32 %s51, 1
      %p55 = scmp.eq.s32.totalorder %s17, 1
      %p56 = scmp.ne.s32.totalorder %s51, %s53
      %p57 = scmp.eq.s32.totalorder %s17, 0
      %p58 = por %p56, %p57
      %p59 = scmp.ne.s32.totalorder %s51, %s53
      %p60 = scmp.eq.s32.totalorder %s22, 1
      %p61 = por %p59, %p60
      %p62 = scmp.ne.s32.totalorder %s53, %s54
      %p63 = scmp.eq.s32.totalorder %s22, 0
      %p64 = por %p62, %p63
      %p65 = scmp.ne.s32.totalorder %s53, %s54
      %p66 = scmp.eq.s32.totalorder %s23, 1
      %p67 = por %p65, %p66
      %p69 = scmp.ne.s32.totalorder %s54, %s68
      %p70 = scmp.eq.s32.totalorder %s23, 0
      %p71 = por %p69, %p70
      %s73 = sadd.s32 %s72, 1
      %p76 = scmp.eq.s32.totalorder %s17, 1
      %p77 = scmp.ne.s32.totalorder %s72, %s74
      %p78 = scmp.eq.s32.totalorder %s17, 0
      %p79 = por %p77, %p78
      %p80 = scmp.ne.s32.totalorder %s72, %s74
      %p81 = scmp.eq.s32.totalorder %s22, 1
      %p82 = por %p80, %p81
      %p83 = scmp.ne.s32.totalorder %s74, %s75
      %p84 = scmp.eq.s32.totalorder %s22, 0
      %p85 = por %p83, %p84
      %p86 = scmp.ne.s32.totalorder %s74, %s75
      %p87 = scmp.eq.s32.totalorder %s23, 1
      %p88 = por %p86, %p87
      %p90 = scmp.ne.s32.totalorder %s75, %s89
      %p91 = scmp.eq.s32.totalorder %s23, 0
      %p92 = por %p90, %p91
      %s94 = sadd.s32 %s93, 1
      %p97 = scmp.eq.s32.totalorder %s17, 1
      %p98 = scmp.ne.s32.totalorder %s93, %s95
      %p99 = scmp.eq.s32.totalorder %s17, 0
      %p100 = por %p98, %p99
      %p101 = scmp.ne.s32.totalorder %s93, %s95
      %p102 = scmp.eq.s32.totalorder %s22, 1
      %p103 = por %p101, %p102
      %p104 = scmp.ne.s32.totalorder %s95, %s96
      %p105 = scmp.eq.s32.totalorder %s22, 0
      %p106 = por %p104, %p105
      %p107 = scmp.ne.s32.totalorder %s95, %s96
      %p108 = scmp.eq.s32.totalorder %s23, 1
      %p109 = por %p107, %p108
      %p111 = scmp.ne.s32.totalorder %s96, %s110
      %p112 = scmp.eq.s32.totalorder %s23, 0
      %p113 = por %p111, %p112
      %s114 = ssub.s32 %s17, %s24
      %p115 = scmp.eq.s32.totalorder %s114, 0
      %s117 = sadd.s32 %s116, 1
      %s118 = scalar_select %p115, %s116, %s117
      %p121 = pneg %p115
      %p122 = scmp.eq.s32.totalorder %s17, 1
      %p123 = por %p121, %p122
      %p124 = scmp.ne.s32.totalorder %s116, %s119
      %p125 = scmp.eq.s32.totalorder %s17, 0
      %p126 = por %p124, %p125
      %p127 = scmp.ne.s32.totalorder %s116, %s119
      %p128 = scmp.eq.s32.totalorder %s22, 1
      %p129 = por %p127, %p128
      %p130 = scmp.ne.s32.totalorder %s119, %s120
      %p131 = scmp.eq.s32.totalorder %s22, 0
      %p132 = por %p130, %p131
      %p133 = scmp.ne.s32.totalorder %s119, %s120
      %p134 = scmp.eq.s32.totalorder %s23, 1
      %p135 = por %p133, %p134
      %p137 = scmp.ne.s32.totalorder %s120, %s136
      %p138 = scmp.eq.s32.totalorder %s23, 0
      %p139 = por %p137, %p138
      %p140 = scmp.le.s32.totalorder 1, %s17
      %p141 = scmp.lt.s32.totalorder %s17, 3
      %p142 = pnand %p140, %p141
      %p143 = pneg %p142
      // Predicated region
      $region9: #{tpu_custom_call.1} parent=5 // pred_check
        _
      $region10: #{tpu_custom_call.1} parent=5 // pred_check_branch
        %145 = sbr.rel (%p142) target = $region12
      $region11: #{tpu_custom_call.1} parent=5 // pred_region
        %s146 = ssub.s32 %s17, 1
        // Predicated region
        $region13: #{tpu_custom_call.1} parent=11 // pred_check
          %p147 = pneg %p64
        $region14: #{tpu_custom_call.1} parent=11 // pred_check_branch
          %149 = sbr.rel (%p147) target = $region16
        $region15: #{tpu_custom_call.1} parent=11 // pred_region
          %s151 = ssub.s32 12288, 12288
          %152 = vsyncadd [#allocation6], %s151
          %s153 = sshll.u32 [#allocation5], 4
          %s154 = int_to_ptr.vmem [resolvable:$true] %s153
          %159 = dma.hbm_to_vmem [thread:$0]  %s1, 12288, %s154, [#allocation6], 64, 64, 4
        $region16: #{tpu_custom_call.1} parent=11 // pred_fallthru
          _
        // Predicated region
        $region17: #{tpu_custom_call.1} parent=11 // pred_check
          %p160 = pneg %p85
        $region18: #{tpu_custom_call.1} parent=11 // pred_check_branch
          %162 = sbr.rel (%p160) target = $region20
        $region19: #{tpu_custom_call.1} parent=11 // pred_region
          _
        $region20: #{tpu_custom_call.1} parent=11 // pred_fallthru
          _
        // Predicated region
        $region21: #{tpu_custom_call.1} parent=11 // pred_check
          %p163 = pneg %p106
        $region22: #{tpu_custom_call.1} parent=11 // pred_check_branch
          %165 = sbr.rel (%p163) target = $region24
        $region23: #{tpu_custom_call.1} parent=11 // pred_region
          %s167 = ssub.s32 2048, 2048
          %168 = vsyncadd [#allocation6], %s167
          %s169 = sshll.u32 [#allocation7], 4
          %s170 = int_to_ptr.vmem [resolvable:$true] %s169
          %175 = dma.hbm_to_vmem [thread:$0]  %s3, 2048, %s170, [#allocation6], 128, 128, 8
        $region24: #{tpu_custom_call.1} parent=11 // pred_fallthru
          _
      $region12: #{tpu_custom_call.1} parent=5 // pred_fallthru
        _
      %p176 = scmp.lt.s32.totalorder %s17, 2
      // Predicated region
      $region25: #{tpu_custom_call.1} parent=5 // pred_check
        %p177 = pneg %p176
      $region26: #{tpu_custom_call.1} parent=5 // pred_check_branch
        %179 = sbr.rel (%p177) target = $region28
      $region27: #{tpu_custom_call.1} parent=5 // pred_region
        // Predicated region
        $region29: #{tpu_custom_call.1} parent=27 // pred_check
          %p180 = pneg %p37
        $region30: #{tpu_custom_call.1} parent=27 // pred_check_branch
          %182 = sbr.rel (%p180) target = $region32
        $region31: #{tpu_custom_call.1} parent=27 // pred_region
          %s183 = sand.u32 %s27, 1
          %s184 = scalar_lea.sflag [#allocation3], %s183
          %s185 = sand.u32 %s27, 1
          %s186 = smul.addr %s185, 96
          %s187 = scalar_lea.vmem [#allocation2], %s186
          %s188 = smul.u32 2, %s17
          %s190 = ssub.s32 1536, 1536
          %191 = vsyncadd %s184, %s190
          %s192 = smul.addr %s188, 12
          %s193 = smul.addr %s192, 64
          %s194 = scalar_lea.hbm %s0, %s193
          %s195 = sshll.u32 %s187, 4
          %s196 = int_to_ptr.vmem [resolvable:$true] %s195
          %201 = dma.hbm_to_vmem [thread:$0]  %s194, 1536, %s196, %s184, 768, 768, 48
        $region32: #{tpu_custom_call.1} parent=27 // pred_fallthru
          _
      $region28: #{tpu_custom_call.1} parent=5 // pred_fallthru
        _
      %p202 = scmp.le.s32.totalorder 1, %s17
      %p203 = scmp.lt.s32.totalorder %s17, 3
      %p204 = pnand %p202, %p203
      %p205 = pneg %p204
      // Predicated region
      $region33: #{tpu_custom_call.1} parent=5 // pred_check
        _
      $region34: #{tpu_custom_call.1} parent=5 // pred_check_branch
        %207 = sbr.rel (%p204) target = $region36
      $region35: #{tpu_custom_call.1} parent=5 // pred_region
        %s208 = ssub.s32 %s17, 1
        %s209 = sand.u32 %s30, 1
        %s210 = scalar_lea.sflag [#allocation3], %s209
        %s211 = sand.u32 %s30, 1
        %s212 = smul.addr %s211, 96
        %s213 = scalar_lea.vmem [#allocation2], %s212
        // Predicated region
        $region37: #{tpu_custom_call.1} parent=35 // pred_check
          %p214 = pneg %p43
        $region38: #{tpu_custom_call.1} parent=35 // pred_check_branch
          %216 = sbr.rel (%p214) target = $region40
        $region39: #{tpu_custom_call.1} parent=35 // pred_region
          %217 = dma.done %s210, 1536
        $region40: #{tpu_custom_call.1} parent=35 // pred_fallthru
          _
        // Predicated region
        $region41: #{tpu_custom_call.1} parent=35 // pred_check
          %p218 = pneg %p64
        $region42: #{tpu_custom_call.1} parent=35 // pred_check_branch
          %220 = sbr.rel (%p218) target = $region44
        $region43: #{tpu_custom_call.1} parent=35 // pred_region
          %221 = dma.done [#allocation6], 12288
        $region44: #{tpu_custom_call.1} parent=35 // pred_fallthru
          _
        // Predicated region
        $region45: #{tpu_custom_call.1} parent=35 // pred_check
          %p222 = pneg %p106
        $region46: #{tpu_custom_call.1} parent=35 // pred_check_branch
          %224 = sbr.rel (%p222) target = $region48
        $region47: #{tpu_custom_call.1} parent=35 // pred_region
          %225 = dma.done [#allocation6], 2048
        $region48: #{tpu_custom_call.1} parent=35 // pred_fallthru
          _
        %s226 = sand.u32 %s30, 1
        %s227 = scalar_lea.sflag [#allocation3], %s226
        %s228 = sand.u32 %s30, 1
        %s229 = smul.addr %s228, 96
        %s230 = scalar_lea.vmem [#allocation2], %s229
        %p231 = pneg %p43
        %p232 = pneg %p40
        %p233 = pneg %p64
        %p234 = pneg %p61
        %p235 = pneg %p85
        %p236 = pneg %p82
        %p237 = pneg %p106
        %p238 = pneg %p103
        %p239 = pneg %p132
        %p240 = pneg %p129
        %s241 = sand.u32 %s119, 1
        %s242 = scalar_lea.sflag [#allocation4], %s241
        %s243 = sand.u32 %s119, 1
        %s244 = smul.addr %s243, 16
        %s245 = scalar_lea.vmem [#allocation8], %s244
        %s246 = smul.u32 2, %s22
        %s247 = smul.u32 2, %s22
        %v249 = vld [vmem:[%s213] sm:$0xff]
        %v250 = vld [vmem:[%s213 + $0x8] sm:$0xff]
        %v251 = vld [vmem:[%s213 + $0x10] sm:$0xff]
        %v252 = vld [vmem:[%s213 + $0x18] sm:$0xff]
        %v253 = vld [vmem:[%s213 + $0x20] sm:$0xff]
        %v254 = vld [vmem:[%s213 + $0x28] sm:$0xff]
        %v255 = vld [vmem:[%s213 + $0x30] sm:$0xff]
        %v256 = vld [vmem:[%s213 + $0x38] sm:$0xff]
        %v257 = vld [vmem:[%s213 + $0x40] sm:$0xff]
        %v258 = vld [vmem:[%s213 + $0x48] sm:$0xff]
        %v259 = vld [vmem:[%s213 + $0x50] sm:$0xff]
        %v260 = vld [vmem:[%s213 + $0x58] sm:$0xff]
        %v261 = vld [vmem:[#allocation5] sm:$0xf]
        %v262 = vld [vmem:[#allocation5 + $0x4] sm:$0xf]
        %v263 = vld [vmem:[#allocation5 + $0x8] sm:$0xf]
        %v264 = vld [vmem:[#allocation5 + $0xc] sm:$0xf]
        %v265 = vld [vmem:[#allocation5 + $0x10] sm:$0xf]
        %v266 = vld [vmem:[#allocation5 + $0x14] sm:$0xf]
        %v267 = vld [vmem:[#allocation5 + $0x18] sm:$0xf]
        %v268 = vld [vmem:[#allocation5 + $0x1c] sm:$0xf]
        %v269 = vld [vmem:[#allocation5 + $0x20] sm:$0xf]
        %v270 = vld [vmem:[#allocation5 + $0x24] sm:$0xf]
        %v271 = vld [vmem:[#allocation5 + $0x28] sm:$0xf]
        %v272 = vld [vmem:[#allocation5 + $0x2c] sm:$0xf]
        %v273 = vld [vmem:[#allocation5 + $0x30] sm:$0xf]
        %v274 = vld [vmem:[#allocation5 + $0x34] sm:$0xf]
        %v275 = vld [vmem:[#allocation5 + $0x38] sm:$0xf]
        %v276 = vld [vmem:[#allocation5 + $0x3c] sm:$0xf]
        %v277 = vld [vmem:[#allocation5 + $0x40] sm:$0xf]
        %v278 = vld [vmem:[#allocation5 + $0x44] sm:$0xf]
        %v279 = vld [vmem:[#allocation5 + $0x48] sm:$0xf]
        %v280 = vld [vmem:[#allocation5 + $0x4c] sm:$0xf]
        %v281 = vld [vmem:[#allocation5 + $0x50] sm:$0xf]
        %v282 = vld [vmem:[#allocation5 + $0x54] sm:$0xf]
        %v283 = vld [vmem:[#allocation5 + $0x58] sm:$0xf]
        %v284 = vld [vmem:[#allocation5 + $0x5c] sm:$0xf]
        %v285 = vld [vmem:[#allocation5 + $0x60] sm:$0xf]
        %v286 = vld [vmem:[#allocation5 + $0x64] sm:$0xf]
        %v287 = vld [vmem:[#allocation5 + $0x68] sm:$0xf]
        %v288 = vld [vmem:[#allocation5 + $0x6c] sm:$0xf]
        %v289 = vld [vmem:[#allocation5 + $0x70] sm:$0xf]
        %v290 = vld [vmem:[#allocation5 + $0x74] sm:$0xf]
        %v291 = vld [vmem:[#allocation5 + $0x78] sm:$0xf]
        %v292 = vld [vmem:[#allocation5 + $0x7c] sm:$0xf]
        %v293 = vld [vmem:[#allocation5 + $0x80] sm:$0xf]
        %v294 = vld [vmem:[#allocation5 + $0x84] sm:$0xf]
        %v295 = vld [vmem:[#allocation5 + $0x88] sm:$0xf]
        %v296 = vld [vmem:[#allocation5 + $0x8c] sm:$0xf]
        %v297 = vld [vmem:[#allocation5 + $0x90] sm:$0xf]
        %v298 = vld [vmem:[#allocation5 + $0x94] sm:$0xf]
        %v299 = vld [vmem:[#allocation5 + $0x98] sm:$0xf]
        %v300 = vld [vmem:[#allocation5 + $0x9c] sm:$0xf]
        %v301 = vld [vmem:[#allocation5 + $0xa0] sm:$0xf]
        %v302 = vld [vmem:[#allocation5 + $0xa4] sm:$0xf]
        %v303 = vld [vmem:[#allocation5 + $0xa8] sm:$0xf]
        %v304 = vld [vmem:[#allocation5 + $0xac] sm:$0xf]
        %v305 = vld [vmem:[#allocation5 + $0xb0] sm:$0xf]
        %v306 = vld [vmem:[#allocation5 + $0xb4] sm:$0xf]
        %v307 = vld [vmem:[#allocation5 + $0xb8] sm:$0xf]
        %v308 = vld [vmem:[#allocation5 + $0xbc] sm:$0xf]
        %v309 = vld [vmem:[#allocation5 + $0xc0] sm:$0xf]
        %v310 = vld [vmem:[#allocation5 + $0xc4] sm:$0xf]
        %v311 = vld [vmem:[#allocation5 + $0xc8] sm:$0xf]
        %v312 = vld [vmem:[#allocation5 + $0xcc] sm:$0xf]
        %v313 = vld [vmem:[#allocation5 + $0xd0] sm:$0xf]
        %v314 = vld [vmem:[#allocation5 + $0xd4] sm:$0xf]
        %v315 = vld [vmem:[#allocation5 + $0xd8] sm:$0xf]
        %v316 = vld [vmem:[#allocation5 + $0xdc] sm:$0xf]
        %v317 = vld [vmem:[#allocation5 + $0xe0] sm:$0xf]
        %v318 = vld [vmem:[#allocation5 + $0xe4] sm:$0xf]
        %v319 = vld [vmem:[#allocation5 + $0xe8] sm:$0xf]
        %v320 = vld [vmem:[#allocation5 + $0xec] sm:$0xf]
        %v321 = vld [vmem:[#allocation5 + $0xf0] sm:$0xf]
        %v322 = vld [vmem:[#allocation5 + $0xf4] sm:$0xf]
        %v323 = vld [vmem:[#allocation5 + $0xf8] sm:$0xf]
        %v324 = vld [vmem:[#allocation5 + $0xfc] sm:$0xf]
        %v325 = vld [vmem:[#allocation5 + $0x100] sm:$0xf]
        %v326 = vld [vmem:[#allocation5 + $0x104] sm:$0xf]
        %v327 = vld [vmem:[#allocation5 + $0x108] sm:$0xf]
        %v328 = vld [vmem:[#allocation5 + $0x10c] sm:$0xf]
        %v329 = vld [vmem:[#allocation5 + $0x110] sm:$0xf]
        %v330 = vld [vmem:[#allocation5 + $0x114] sm:$0xf]
        %v331 = vld [vmem:[#allocation5 + $0x118] sm:$0xf]
        %v332 = vld [vmem:[#allocation5 + $0x11c] sm:$0xf]
        %v333 = vld [vmem:[#allocation5 + $0x120] sm:$0xf]
        %v334 = vld [vmem:[#allocation5 + $0x124] sm:$0xf]
        %v335 = vld [vmem:[#allocation5 + $0x128] sm:$0xf]
        %v336 = vld [vmem:[#allocation5 + $0x12c] sm:$0xf]
        %v337 = vld [vmem:[#allocation5 + $0x130] sm:$0xf]
        %v338 = vld [vmem:[#allocation5 + $0x134] sm:$0xf]
        %v339 = vld [vmem:[#allocation5 + $0x138] sm:$0xf]
        %v340 = vld [vmem:[#allocation5 + $0x13c] sm:$0xf]
        %v341 = vld [vmem:[#allocation5 + $0x140] sm:$0xf]
        %v342 = vld [vmem:[#allocation5 + $0x144] sm:$0xf]
        %v343 = vld [vmem:[#allocation5 + $0x148] sm:$0xf]
        %v344 = vld [vmem:[#allocation5 + $0x14c] sm:$0xf]
        %v345 = vld [vmem:[#allocation5 + $0x150] sm:$0xf]
        %v346 = vld [vmem:[#allocation5 + $0x154] sm:$0xf]
        %v347 = vld [vmem:[#allocation5 + $0x158] sm:$0xf]
        %v348 = vld [vmem:[#allocation5 + $0x15c] sm:$0xf]
        %v349 = vld [vmem:[#allocation5 + $0x160] sm:$0xf]
        %v350 = vld [vmem:[#allocation5 + $0x164] sm:$0xf]
        %v351 = vld [vmem:[#allocation5 + $0x168] sm:$0xf]
        %v352 = vld [vmem:[#allocation5 + $0x16c] sm:$0xf]
        %v353 = vld [vmem:[#allocation5 + $0x170] sm:$0xf]
        %v354 = vld [vmem:[#allocation5 + $0x174] sm:$0xf]
        %v355 = vld [vmem:[#allocation5 + $0x178] sm:$0xf]
        %v356 = vld [vmem:[#allocation5 + $0x17c] sm:$0xf]
        %v357 = vld [vmem:[#allocation5 + $0x180] sm:$0xf]
        %v358 = vld [vmem:[#allocation5 + $0x184] sm:$0xf]
        %v359 = vld [vmem:[#allocation5 + $0x188] sm:$0xf]
        %v360 = vld [vmem:[#allocation5 + $0x18c] sm:$0xf]
        %v361 = vld [vmem:[#allocation5 + $0x190] sm:$0xf]
        %v362 = vld [vmem:[#allocation5 + $0x194] sm:$0xf]
        %v363 = vld [vmem:[#allocation5 + $0x198] sm:$0xf]
        %v364 = vld [vmem:[#allocation5 + $0x19c] sm:$0xf]
        %v365 = vld [vmem:[#allocation5 + $0x1a0] sm:$0xf]
        %v366 = vld [vmem:[#allocation5 + $0x1a4] sm:$0xf]
        %v367 = vld [vmem:[#allocation5 + $0x1a8] sm:$0xf]
        %v368 = vld [vmem:[#allocation5 + $0x1ac] sm:$0xf]
        %v369 = vld [vmem:[#allocation5 + $0x1b0] sm:$0xf]
        %v370 = vld [vmem:[#allocation5 + $0x1b4] sm:$0xf]
        %v371 = vld [vmem:[#allocation5 + $0x1b8] sm:$0xf]
        %v372 = vld [vmem:[#allocation5 + $0x1bc] sm:$0xf]
        %v373 = vld [vmem:[#allocation5 + $0x1c0] sm:$0xf]
        %v374 = vld [vmem:[#allocation5 + $0x1c4] sm:$0xf]
        %v375 = vld [vmem:[#allocation5 + $0x1c8] sm:$0xf]
        %v376 = vld [vmem:[#allocation5 + $0x1cc] sm:$0xf]
        %v377 = vld [vmem:[#allocation5 + $0x1d0] sm:$0xf]
        %v378 = vld [vmem:[#allocation5 + $0x1d4] sm:$0xf]
        %v379 = vld [vmem:[#allocation5 + $0x1d8] sm:$0xf]
        %v380 = vld [vmem:[#allocation5 + $0x1dc] sm:$0xf]
        %v381 = vld [vmem:[#allocation5 + $0x1e0] sm:$0xf]
        %v382 = vld [vmem:[#allocation5 + $0x1e4] sm:$0xf]
        %v383 = vld [vmem:[#allocation5 + $0x1e8] sm:$0xf]
        %v384 = vld [vmem:[#allocation5 + $0x1ec] sm:$0xf]
        %v385 = vld [vmem:[#allocation5 + $0x1f0] sm:$0xf]
        %v386 = vld [vmem:[#allocation5 + $0x1f4] sm:$0xf]
        %v387 = vld [vmem:[#allocation5 + $0x1f8] sm:$0xf]
        %v388 = vld [vmem:[#allocation5 + $0x1fc] sm:$0xf]
        %v389 = vld [vmem:[#allocation5 + $0x200] sm:$0xf]
        %v390 = vld [vmem:[#allocation5 + $0x204] sm:$0xf]
        %v391 = vld [vmem:[#allocation5 + $0x208] sm:$0xf]
        %v392 = vld [vmem:[#allocation5 + $0x20c] sm:$0xf]
        %v393 = vld [vmem:[#allocation5 + $0x210] sm:$0xf]
        %v394 = vld [vmem:[#allocation5 + $0x214] sm:$0xf]
        %v395 = vld [vmem:[#allocation5 + $0x218] sm:$0xf]
        %v396 = vld [vmem:[#allocation5 + $0x21c] sm:$0xf]
        %v397 = vld [vmem:[#allocation5 + $0x220] sm:$0xf]
        %v398 = vld [vmem:[#allocation5 + $0x224] sm:$0xf]
        %v399 = vld [vmem:[#allocation5 + $0x228] sm:$0xf]
        %v400 = vld [vmem:[#allocation5 + $0x22c] sm:$0xf]
        %v401 = vld [vmem:[#allocation5 + $0x230] sm:$0xf]
        %v402 = vld [vmem:[#allocation5 + $0x234] sm:$0xf]
        %v403 = vld [vmem:[#allocation5 + $0x238] sm:$0xf]
        %v404 = vld [vmem:[#allocation5 + $0x23c] sm:$0xf]
        %v405 = vld [vmem:[#allocation5 + $0x240] sm:$0xf]
        %v406 = vld [vmem:[#allocation5 + $0x244] sm:$0xf]
        %v407 = vld [vmem:[#allocation5 + $0x248] sm:$0xf]
        %v408 = vld [vmem:[#allocation5 + $0x24c] sm:$0xf]
        %v409 = vld [vmem:[#allocation5 + $0x250] sm:$0xf]
        %v410 = vld [vmem:[#allocation5 + $0x254] sm:$0xf]
        %v411 = vld [vmem:[#allocation5 + $0x258] sm:$0xf]
        %v412 = vld [vmem:[#allocation5 + $0x25c] sm:$0xf]
        %v413 = vld [vmem:[#allocation5 + $0x260] sm:$0xf]
        %v414 = vld [vmem:[#allocation5 + $0x264] sm:$0xf]
        %v415 = vld [vmem:[#allocation5 + $0x268] sm:$0xf]
        %v416 = vld [vmem:[#allocation5 + $0x26c] sm:$0xf]
        %v417 = vld [vmem:[#allocation5 + $0x270] sm:$0xf]
        %v418 = vld [vmem:[#allocation5 + $0x274] sm:$0xf]
        %v419 = vld [vmem:[#allocation5 + $0x278] sm:$0xf]
        %v420 = vld [vmem:[#allocation5 + $0x27c] sm:$0xf]
        %v421 = vld [vmem:[#allocation5 + $0x280] sm:$0xf]
        %v422 = vld [vmem:[#allocation5 + $0x284] sm:$0xf]
        %v423 = vld [vmem:[#allocation5 + $0x288] sm:$0xf]
        %v424 = vld [vmem:[#allocation5 + $0x28c] sm:$0xf]
        %v425 = vld [vmem:[#allocation5 + $0x290] sm:$0xf]
        %v426 = vld [vmem:[#allocation5 + $0x294] sm:$0xf]
        %v427 = vld [vmem:[#allocation5 + $0x298] sm:$0xf]
        %v428 = vld [vmem:[#allocation5 + $0x29c] sm:$0xf]
        %v429 = vld [vmem:[#allocation5 + $0x2a0] sm:$0xf]
        %v430 = vld [vmem:[#allocation5 + $0x2a4] sm:$0xf]
        %v431 = vld [vmem:[#allocation5 + $0x2a8] sm:$0xf]
        %v432 = vld [vmem:[#allocation5 + $0x2ac] sm:$0xf]
        %v433 = vld [vmem:[#allocation5 + $0x2b0] sm:$0xf]
        %v434 = vld [vmem:[#allocation5 + $0x2b4] sm:$0xf]
        %v435 = vld [vmem:[#allocation5 + $0x2b8] sm:$0xf]
        %v436 = vld [vmem:[#allocation5 + $0x2bc] sm:$0xf]
        %v437 = vld [vmem:[#allocation5 + $0x2c0] sm:$0xf]
        %v438 = vld [vmem:[#allocation5 + $0x2c4] sm:$0xf]
        %v439 = vld [vmem:[#allocation5 + $0x2c8] sm:$0xf]
        %v440 = vld [vmem:[#allocation5 + $0x2cc] sm:$0xf]
        %v441 = vld [vmem:[#allocation5 + $0x2d0] sm:$0xf]
        %v442 = vld [vmem:[#allocation5 + $0x2d4] sm:$0xf]
        %v443 = vld [vmem:[#allocation5 + $0x2d8] sm:$0xf]
        %v444 = vld [vmem:[#allocation5 + $0x2dc] sm:$0xf]
        %v445 = vld [vmem:[#allocation5 + $0x2e0] sm:$0xf]
        %v446 = vld [vmem:[#allocation5 + $0x2e4] sm:$0xf]
        %v447 = vld [vmem:[#allocation5 + $0x2e8] sm:$0xf]
        %v448 = vld [vmem:[#allocation5 + $0x2ec] sm:$0xf]
        %v449 = vld [vmem:[#allocation5 + $0x2f0] sm:$0xf]
        %v450 = vld [vmem:[#allocation5 + $0x2f4] sm:$0xf]
        %v451 = vld [vmem:[#allocation5 + $0x2f8] sm:$0xf]
        %v452 = vld [vmem:[#allocation5 + $0x2fc] sm:$0xf]
        %v453 = vld [vmem:[%s2] sm:$0x1]
        %v455 = vlaneseq
        %v456 = vshrl.u32 %v455, 7
        %v457 = vsub.s32 0, %v456
        %v458 = vrot.slane %v453, %v457
        %v472 = vunpack.c.l.b16 %v249
        %v473 = vunpack.c.h.b16 %v249
        %v474 = vunpack.c.l.b16 %v250
        %v475 = vunpack.c.h.b16 %v250
        %v476 = vunpack.c.l.b16 %v251
        %v477 = vunpack.c.h.b16 %v251
        %v478 = vunpack.c.l.b16 %v252
        %v479 = vunpack.c.h.b16 %v252
        %v480 = vunpack.c.l.b16 %v253
        %v481 = vunpack.c.h.b16 %v253
        %v482 = vunpack.c.l.b16 %v254
        %v483 = vunpack.c.h.b16 %v254
        %v484 = vunpack.c.l.b16 %v255
        %v485 = vunpack.c.h.b16 %v255
        %v486 = vunpack.c.l.b16 %v256
        %v487 = vunpack.c.h.b16 %v256
        %v488 = vunpack.c.l.b16 %v257
        %v489 = vunpack.c.h.b16 %v257
        %v490 = vunpack.c.l.b16 %v258
        %v491 = vunpack.c.h.b16 %v258
        %v492 = vunpack.c.l.b16 %v259
        %v493 = vunpack.c.h.b16 %v259
        %v494 = vunpack.c.l.b16 %v260
        %v495 = vunpack.c.h.b16 %v260
        %v496 = vpack.c.b16 %v484, %v472
        %v497 = vpack.c.b16 %v485, %v473
        %v498 = vpack.c.b16 %v486, %v474
        %v499 = vpack.c.b16 %v487, %v475
        %v500 = vpack.c.b16 %v488, %v476
        %v501 = vpack.c.b16 %v489, %v477
        %v502 = vpack.c.b16 %v490, %v478
        %v503 = vpack.c.b16 %v491, %v479
        %v504 = vpack.c.b16 %v492, %v480
        %v505 = vpack.c.b16 %v493, %v481
        %v506 = vpack.c.b16 %v494, %v482
        %v507 = vpack.c.b16 %v495, %v483
        %v712 = vunpack.c.l.b16 %v261
        %v713 = vunpack.c.l.b16 %v262
        %v714 = vunpack.c.l.b16 %v263
        %v715 = vunpack.c.l.b16 %v264
        %v716 = vunpack.c.l.b16 %v265
        %v717 = vunpack.c.l.b16 %v266
        %v718 = vunpack.c.l.b16 %v267
        %v719 = vunpack.c.l.b16 %v268
        %v720 = vunpack.c.l.b16 %v269
        %v721 = vunpack.c.l.b16 %v270
        %v722 = vunpack.c.l.b16 %v271
        %v723 = vunpack.c.l.b16 %v272
        %v724 = vunpack.c.l.b16 %v273
        %v725 = vunpack.c.l.b16 %v274
        %v726 = vunpack.c.l.b16 %v275
        %v727 = vunpack.c.l.b16 %v276
        %v728 = vunpack.c.l.b16 %v277
        %v729 = vunpack.c.l.b16 %v278
        %v730 = vunpack.c.l.b16 %v279
        %v731 = vunpack.c.l.b16 %v280
        %v732 = vunpack.c.l.b16 %v281
        %v733 = vunpack.c.l.b16 %v282
        %v734 = vunpack.c.l.b16 %v283
        %v735 = vunpack.c.l.b16 %v284
        %v736 = vunpack.c.l.b16 %v285
        %v737 = vunpack.c.l.b16 %v286
        %v738 = vunpack.c.l.b16 %v287
        %v739 = vunpack.c.l.b16 %v288
        %v740 = vunpack.c.l.b16 %v289
        %v741 = vunpack.c.l.b16 %v290
        %v742 = vunpack.c.l.b16 %v291
        %v743 = vunpack.c.l.b16 %v292
        %v744 = vunpack.c.l.b16 %v293
        %v745 = vunpack.c.l.b16 %v294
        %v746 = vunpack.c.l.b16 %v295
        %v747 = vunpack.c.l.b16 %v296
        %v748 = vunpack.c.l.b16 %v297
        %v749 = vunpack.c.l.b16 %v298
        %v750 = vunpack.c.l.b16 %v299
        %v751 = vunpack.c.l.b16 %v300
        %v752 = vunpack.c.l.b16 %v301
        %v753 = vunpack.c.l.b16 %v302
        %v754 = vunpack.c.l.b16 %v303
        %v755 = vunpack.c.l.b16 %v304
        %v756 = vunpack.c.l.b16 %v305
        %v757 = vunpack.c.l.b16 %v306
        %v758 = vunpack.c.l.b16 %v307
        %v759 = vunpack.c.l.b16 %v308
        %v760 = vunpack.c.l.b16 %v309
        %v761 = vunpack.c.l.b16 %v310
        %v762 = vunpack.c.l.b16 %v311
        %v763 = vunpack.c.l.b16 %v312
        %v764 = vunpack.c.l.b16 %v313
        %v765 = vunpack.c.l.b16 %v314
        %v766 = vunpack.c.l.b16 %v315
        %v767 = vunpack.c.l.b16 %v316
        %v768 = vunpack.c.l.b16 %v317
        %v769 = vunpack.c.l.b16 %v318
        %v770 = vunpack.c.l.b16 %v319
        %v771 = vunpack.c.l.b16 %v320
        %v772 = vunpack.c.l.b16 %v321
        %v773 = vunpack.c.l.b16 %v322
        %v774 = vunpack.c.l.b16 %v323
        %v775 = vunpack.c.l.b16 %v324
        %v776 = vunpack.c.l.b16 %v325
        %v777 = vunpack.c.l.b16 %v326
        %v778 = vunpack.c.l.b16 %v327
        %v779 = vunpack.c.l.b16 %v328
        %v780 = vunpack.c.l.b16 %v329
        %v781 = vunpack.c.l.b16 %v330
        %v782 = vunpack.c.l.b16 %v331
        %v783 = vunpack.c.l.b16 %v332
        %v784 = vunpack.c.l.b16 %v333
        %v785 = vunpack.c.l.b16 %v334
        %v786 = vunpack.c.l.b16 %v335
        %v787 = vunpack.c.l.b16 %v336
        %v788 = vunpack.c.l.b16 %v337
        %v789 = vunpack.c.l.b16 %v338
        %v790 = vunpack.c.l.b16 %v339
        %v791 = vunpack.c.l.b16 %v340
        %v792 = vunpack.c.l.b16 %v341
        %v793 = vunpack.c.l.b16 %v342
        %v794 = vunpack.c.l.b16 %v343
        %v795 = vunpack.c.l.b16 %v344
        %v796 = vunpack.c.l.b16 %v345
        %v797 = vunpack.c.l.b16 %v346
        %v798 = vunpack.c.l.b16 %v347
        %v799 = vunpack.c.l.b16 %v348
        %v800 = vunpack.c.l.b16 %v349
        %v801 = vunpack.c.l.b16 %v350
        %v802 = vunpack.c.l.b16 %v351
        %v803 = vunpack.c.l.b16 %v352
        %v804 = vunpack.c.l.b16 %v353
        %v805 = vunpack.c.l.b16 %v354
        %v806 = vunpack.c.l.b16 %v355
        %v807 = vunpack.c.l.b16 %v356
        %v808 = vunpack.c.l.b16 %v357
        %v809 = vunpack.c.l.b16 %v358
        %v810 = vunpack.c.l.b16 %v359
        %v811 = vunpack.c.l.b16 %v360
        %v812 = vunpack.c.l.b16 %v361
        %v813 = vunpack.c.l.b16 %v362
        %v814 = vunpack.c.l.b16 %v363
        %v815 = vunpack.c.l.b16 %v364
        %v816 = vunpack.c.l.b16 %v365
        %v817 = vunpack.c.l.b16 %v366
        %v818 = vunpack.c.l.b16 %v367
        %v819 = vunpack.c.l.b16 %v368
        %v820 = vunpack.c.l.b16 %v369
        %v821 = vunpack.c.l.b16 %v370
        %v822 = vunpack.c.l.b16 %v371
        %v823 = vunpack.c.l.b16 %v372
        %v824 = vunpack.c.l.b16 %v373
        %v825 = vunpack.c.l.b16 %v374
        %v826 = vunpack.c.l.b16 %v375
        %v827 = vunpack.c.l.b16 %v376
        %v828 = vunpack.c.l.b16 %v377
        %v829 = vunpack.c.l.b16 %v378
        %v830 = vunpack.c.l.b16 %v379
        %v831 = vunpack.c.l.b16 %v380
        %v832 = vunpack.c.l.b16 %v381
        %v833 = vunpack.c.l.b16 %v382
        %v834 = vunpack.c.l.b16 %v383
        %v835 = vunpack.c.l.b16 %v384
        %v836 = vunpack.c.l.b16 %v385
        %v837 = vunpack.c.l.b16 %v386
        %v838 = vunpack.c.l.b16 %v387
        %v839 = vunpack.c.l.b16 %v388
        %v840 = vunpack.c.l.b16 %v389
        %v841 = vunpack.c.l.b16 %v390
        %v842 = vunpack.c.l.b16 %v391
        %v843 = vunpack.c.l.b16 %v392
        %v844 = vunpack.c.l.b16 %v393
        %v845 = vunpack.c.l.b16 %v394
        %v846 = vunpack.c.l.b16 %v395
        %v847 = vunpack.c.l.b16 %v396
        %v848 = vunpack.c.l.b16 %v397
        %v849 = vunpack.c.l.b16 %v398
        %v850 = vunpack.c.l.b16 %v399
        %v851 = vunpack.c.l.b16 %v400
        %v852 = vunpack.c.l.b16 %v401
        %v853 = vunpack.c.l.b16 %v402
        %v854 = vunpack.c.l.b16 %v403
        %v855 = vunpack.c.l.b16 %v404
        %v856 = vunpack.c.l.b16 %v405
        %v857 = vunpack.c.l.b16 %v406
        %v858 = vunpack.c.l.b16 %v407
        %v859 = vunpack.c.l.b16 %v408
        %v860 = vunpack.c.l.b16 %v409
        %v861 = vunpack.c.l.b16 %v410
        %v862 = vunpack.c.l.b16 %v411
        %v863 = vunpack.c.l.b16 %v412
        %v864 = vunpack.c.l.b16 %v413
        %v865 = vunpack.c.l.b16 %v414
        %v866 = vunpack.c.l.b16 %v415
        %v867 = vunpack.c.l.b16 %v416
        %v868 = vunpack.c.l.b16 %v417
        %v869 = vunpack.c.l.b16 %v418
        %v870 = vunpack.c.l.b16 %v419
        %v871 = vunpack.c.l.b16 %v420
        %v872 = vunpack.c.l.b16 %v421
        %v873 = vunpack.c.l.b16 %v422
        %v874 = vunpack.c.l.b16 %v423
        %v875 = vunpack.c.l.b16 %v424
        %v876 = vunpack.c.l.b16 %v425
        %v877 = vunpack.c.l.b16 %v426
        %v878 = vunpack.c.l.b16 %v427
        %v879 = vunpack.c.l.b16 %v428
        %v880 = vunpack.c.l.b16 %v429
        %v881 = vunpack.c.l.b16 %v430
        %v882 = vunpack.c.l.b16 %v431
        %v883 = vunpack.c.l.b16 %v432
        %v884 = vunpack.c.l.b16 %v433
        %v885 = vunpack.c.l.b16 %v434
        %v886 = vunpack.c.l.b16 %v435
        %v887 = vunpack.c.l.b16 %v436
        %v888 = vunpack.c.l.b16 %v437
        %v889 = vunpack.c.l.b16 %v438
        %v890 = vunpack.c.l.b16 %v439
        %v891 = vunpack.c.l.b16 %v440
        %v892 = vunpack.c.l.b16 %v441
        %v893 = vunpack.c.l.b16 %v442
        %v894 = vunpack.c.l.b16 %v443
        %v895 = vunpack.c.l.b16 %v444
        %v896 = vunpack.c.l.b16 %v445
        %v897 = vunpack.c.l.b16 %v446
        %v898 = vunpack.c.l.b16 %v447
        %v899 = vunpack.c.l.b16 %v448
        %v900 = vunpack.c.l.b16 %v449
        %v901 = vunpack.c.l.b16 %v450
        %v902 = vunpack.c.l.b16 %v451
        %v903 = vunpack.c.l.b16 %v452
        %v904 = vpack.c.b16 %v713, %v712
        %v905 = vpack.c.b16 %v715, %v714
        %v906 = vpack.c.b16 %v717, %v716
        %v907 = vpack.c.b16 %v719, %v718
        %v908 = vpack.c.b16 %v721, %v720
        %v909 = vpack.c.b16 %v723, %v722
        %v910 = vpack.c.b16 %v725, %v724
        %v911 = vpack.c.b16 %v727, %v726
        %v912 = vpack.c.b16 %v729, %v728
        %v913 = vpack.c.b16 %v731, %v730
        %v914 = vpack.c.b16 %v733, %v732
        %v915 = vpack.c.b16 %v735, %v734
        %v916 = vpack.c.b16 %v737, %v736
        %v917 = vpack.c.b16 %v739, %v738
        %v918 = vpack.c.b16 %v741, %v740
        %v919 = vpack.c.b16 %v743, %v742
        %v920 = vpack.c.b16 %v745, %v744
        %v921 = vpack.c.b16 %v747, %v746
        %v922 = vpack.c.b16 %v749, %v748
        %v923 = vpack.c.b16 %v751, %v750
        %v924 = vpack.c.b16 %v753, %v752
        %v925 = vpack.c.b16 %v755, %v754
        %v926 = vpack.c.b16 %v757, %v756
        %v927 = vpack.c.b16 %v759, %v758
        %v928 = vpack.c.b16 %v761, %v760
        %v929 = vpack.c.b16 %v763, %v762
        %v930 = vpack.c.b16 %v765, %v764
        %v931 = vpack.c.b16 %v767, %v766
        %v932 = vpack.c.b16 %v769, %v768
        %v933 = vpack.c.b16 %v771, %v770
        %v934 = vpack.c.b16 %v773, %v772
        %v935 = vpack.c.b16 %v775, %v774
        %v936 = vpack.c.b16 %v777, %v776
        %v937 = vpack.c.b16 %v779, %v778
        %v938 = vpack.c.b16 %v781, %v780
        %v939 = vpack.c.b16 %v783, %v782
        %v940 = vpack.c.b16 %v785, %v784
        %v941 = vpack.c.b16 %v787, %v786
        %v942 = vpack.c.b16 %v789, %v788
        %v943 = vpack.c.b16 %v791, %v790
        %v944 = vpack.c.b16 %v793, %v792
        %v945 = vpack.c.b16 %v795, %v794
        %v946 = vpack.c.b16 %v797, %v796
        %v947 = vpack.c.b16 %v799, %v798
        %v948 = vpack.c.b16 %v801, %v800
        %v949 = vpack.c.b16 %v803, %v802
        %v950 = vpack.c.b16 %v805, %v804
        %v951 = vpack.c.b16 %v807, %v806
        %v952 = vpack.c.b16 %v809, %v808
        %v953 = vpack.c.b16 %v811, %v810
        %v954 = vpack.c.b16 %v813, %v812
        %v955 = vpack.c.b16 %v815, %v814
        %v956 = vpack.c.b16 %v817, %v816
        %v957 = vpack.c.b16 %v819, %v818
        %v958 = vpack.c.b16 %v821, %v820
        %v959 = vpack.c.b16 %v823, %v822
        %v960 = vpack.c.b16 %v825, %v824
        %v961 = vpack.c.b16 %v827, %v826
        %v962 = vpack.c.b16 %v829, %v828
        %v963 = vpack.c.b16 %v831, %v830
        %v964 = vpack.c.b16 %v833, %v832
        %v965 = vpack.c.b16 %v835, %v834
        %v966 = vpack.c.b16 %v837, %v836
        %v967 = vpack.c.b16 %v839, %v838
        %v968 = vpack.c.b16 %v841, %v840
        %v969 = vpack.c.b16 %v843, %v842
        %v970 = vpack.c.b16 %v845, %v844
        %v971 = vpack.c.b16 %v847, %v846
        %v972 = vpack.c.b16 %v849, %v848
        %v973 = vpack.c.b16 %v851, %v850
        %v974 = vpack.c.b16 %v853, %v852
        %v975 = vpack.c.b16 %v855, %v854
        %v976 = vpack.c.b16 %v857, %v856
        %v977 = vpack.c.b16 %v859, %v858
        %v978 = vpack.c.b16 %v861, %v860
        %v979 = vpack.c.b16 %v863, %v862
        %v980 = vpack.c.b16 %v865, %v864
        %v981 = vpack.c.b16 %v867, %v866
        %v982 = vpack.c.b16 %v869, %v868
        %v983 = vpack.c.b16 %v871, %v870
        %v984 = vpack.c.b16 %v873, %v872
        %v985 = vpack.c.b16 %v875, %v874
        %v986 = vpack.c.b16 %v877, %v876
        %v987 = vpack.c.b16 %v879, %v878
        %v988 = vpack.c.b16 %v881, %v880
        %v989 = vpack.c.b16 %v883, %v882
        %v990 = vpack.c.b16 %v885, %v884
        %v991 = vpack.c.b16 %v887, %v886
        %v992 = vpack.c.b16 %v889, %v888
        %v993 = vpack.c.b16 %v891, %v890
        %v994 = vpack.c.b16 %v893, %v892
        %v995 = vpack.c.b16 %v895, %v894
        %v996 = vpack.c.b16 %v897, %v896
        %v997 = vpack.c.b16 %v899, %v898
        %v998 = vpack.c.b16 %v901, %v900
        %v999 = vpack.c.b16 %v903, %v902
        %1096 = vmatprep.subr.bf16.mxu0 0
        %1097 = vmatpush1.bf16.msra.mxu0 %v904
        %1098 = vmatprep.subr.bf16.mxu0 0
        %1099 = vmatpush1.bf16.msra.mxu0 %v905
        %1100 = vmatprep.subr.bf16.mxu0 0
        %1101 = vmatpush1.bf16.msra.mxu0 %v906
        %1102 = vmatprep.subr.bf16.mxu0 0
        %1103 = vmatpush1.bf16.msra.mxu0 %v907
        %1104 = vmatprep.subr.bf16.mxu0 0
        %1105 = vmatpush1.bf16.msra.mxu0 %v908
        %1106 = vmatprep.subr.bf16.mxu0 0
        %1107 = vmatpush1.bf16.msra.mxu0 %v909
        %1108 = vmatprep.subr.bf16.mxu0 0
        %1109 = vmatpush1.bf16.msra.mxu0 %v910
        %1110 = vmatprep.subr.bf16.mxu0 0
        %1111 = vmatpush1.bf16.msra.mxu0 %v911
        %1112 = vmatprep.subr.bf16.mxu0 0
        %1113 = vmatpush1.bf16.msra.mxu0 %v912
        %1114 = vmatprep.subr.bf16.mxu0 0
        %1115 = vmatpush1.bf16.msra.mxu0 %v913
        %1116 = vmatprep.subr.bf16.mxu0 0
        %1117 = vmatpush1.bf16.msra.mxu0 %v914
        %1118 = vmatprep.subr.bf16.mxu0 0
        %1119 = vmatpush1.bf16.msra.mxu0 %v915
        %1120 = vmatprep.subr.bf16.mxu0 0
        %1121 = vmatpush1.bf16.msra.mxu0 %v916
        %1122 = vmatprep.subr.bf16.mxu0 0
        %1123 = vmatpush1.bf16.msra.mxu0 %v917
        %1124 = vmatprep.subr.bf16.mxu0 0
        %1125 = vmatpush1.bf16.msra.mxu0 %v918
        %1126 = vmatprep.subr.bf16.mxu0 0
        %1127 = vmatpush1.bf16.msra.mxu0 %v919
        %1128 = vmatprep.mubr.bf16.mxu0 %v497
        %1129 = vmatmul.mubr.bf16.gmra.mrb[0].mxu0 %v496
        %v1130 = vpop.f32.mrb[0].mxu0
        %v1131 = vadd.f32 %v458, %v1130
        %v1132 = vpop.f32.mrb[0].mxu0
        %v1133 = vpop.f32.mrb[0].mxu0
        %v1134 = vadd.f32 %v458, %v1133
        %v1135 = vpop.f32.mrb[0].mxu0
        %1136 = vdwg.mxu0
        %1137 = vmatprep.subr.bf16.mxu0 0
        %1138 = vmatpush1.bf16.msra.mxu0 %v920
        %1139 = vmatprep.subr.bf16.mxu0 0
        %1140 = vmatpush1.bf16.msra.mxu0 %v921
        %1141 = vmatprep.subr.bf16.mxu0 0
        %1142 = vmatpush1.bf16.msra.mxu0 %v922
        %1143 = vmatprep.subr.bf16.mxu0 0
        %1144 = vmatpush1.bf16.msra.mxu0 %v923
        %1145 = vmatprep.subr.bf16.mxu0 0
        %1146 = vmatpush1.bf16.msra.mxu0 %v924
        %1147 = vmatprep.subr.bf16.mxu0 0
        %1148 = vmatpush1.bf16.msra.mxu0 %v925
        %1149 = vmatprep.subr.bf16.mxu0 0
        %1150 = vmatpush1.bf16.msra.mxu0 %v926
        %1151 = vmatprep.subr.bf16.mxu0 0
        %1152 = vmatpush1.bf16.msra.mxu0 %v927
        %1153 = vmatprep.subr.bf16.mxu0 0
        %1154 = vmatpush1.bf16.msra.mxu0 %v928
        %1155 = vmatprep.subr.bf16.mxu0 0
        %1156 = vmatpush1.bf16.msra.mxu0 %v929
        %1157 = vmatprep.subr.bf16.mxu0 0
        %1158 = vmatpush1.bf16.msra.mxu0 %v930
        %1159 = vmatprep.subr.bf16.mxu0 0
        %1160 = vmatpush1.bf16.msra.mxu0 %v931
        %1161 = vmatprep.subr.bf16.mxu0 0
        %1162 = vmatpush1.bf16.msra.mxu0 %v932
        %1163 = vmatprep.subr.bf16.mxu0 0
        %1164 = vmatpush1.bf16.msra.mxu0 %v933
        %1165 = vmatprep.subr.bf16.mxu0 0
        %1166 = vmatpush1.bf16.msra.mxu0 %v934
        %1167 = vmatprep.subr.bf16.mxu0 0
        %1168 = vmatpush1.bf16.msra.mxu0 %v935
        %1169 = vmatprep.mubr.bf16.mxu0 %v499
        %1170 = vmatmul.mubr.bf16.gmra.mrb[0].mxu0 %v498
        %v1171 = vpop.f32.mrb[0].mxu0
        %v1172 = vadd.f32 %v1131, %v1171
        %v1173 = vpop.f32.mrb[0].mxu0
        %v1174 = vpop.f32.mrb[0].mxu0
        %v1175 = vadd.f32 %v1134, %v1174
        %v1176 = vpop.f32.mrb[0].mxu0
        %1177 = vdwg.mxu0
        %1178 = vmatprep.subr.bf16.mxu0 0
        %1179 = vmatpush1.bf16.msra.mxu0 %v936
        %1180 = vmatprep.subr.bf16.mxu0 0
        %1181 = vmatpush1.bf16.msra.mxu0 %v937
        %1182 = vmatprep.subr.bf16.mxu0 0
        %1183 = vmatpush1.bf16.msra.mxu0 %v938
        %1184 = vmatprep.subr.bf16.mxu0 0
        %1185 = vmatpush1.bf16.msra.mxu0 %v939
        %1186 = vmatprep.subr.bf16.mxu0 0
        %1187 = vmatpush1.bf16.msra.mxu0 %v940
        %1188 = vmatprep.subr.bf16.mxu0 0
        %1189 = vmatpush1.bf16.msra.mxu0 %v941
        %1190 = vmatprep.subr.bf16.mxu0 0
        %1191 = vmatpush1.bf16.msra.mxu0 %v942
        %1192 = vmatprep.subr.bf16.mxu0 0
        %1193 = vmatpush1.bf16.msra.mxu0 %v943
        %1194 = vmatprep.subr.bf16.mxu0 0
        %1195 = vmatpush1.bf16.msra.mxu0 %v944
        %1196 = vmatprep.subr.bf16.mxu0 0
        %1197 = vmatpush1.bf16.msra.mxu0 %v945
        %1198 = vmatprep.subr.bf16.mxu0 0
        %1199 = vmatpush1.bf16.msra.mxu0 %v946
        %1200 = vmatprep.subr.bf16.mxu0 0
        %1201 = vmatpush1.bf16.msra.mxu0 %v947
        %1202 = vmatprep.subr.bf16.mxu0 0
        %1203 = vmatpush1.bf16.msra.mxu0 %v948
        %1204 = vmatprep.subr.bf16.mxu0 0
        %1205 = vmatpush1.bf16.msra.mxu0 %v949
        %1206 = vmatprep.subr.bf16.mxu0 0
        %1207 = vmatpush1.bf16.msra.mxu0 %v950
        %1208 = vmatprep.subr.bf16.mxu0 0
        %1209 = vmatpush1.bf16.msra.mxu0 %v951
        %1210 = vmatprep.mubr.bf16.mxu0 %v501
        %1211 = vmatmul.mubr.bf16.gmra.mrb[0].mxu0 %v500
        %v1212 = vpop.f32.mrb[0].mxu0
        %v1213 = vadd.f32 %v1172, %v1212
        %v1214 = vpop.f32.mrb[0].mxu0
        %v1215 = vpop.f32.mrb[0].mxu0
        %v1216 = vadd.f32 %v1175, %v1215
        %v1217 = vpop.f32.mrb[0].mxu0
        %1218 = vdwg.mxu0
        %1219 = vmatprep.subr.bf16.mxu0 0
        %1220 = vmatpush1.bf16.msra.mxu0 %v952
        %1221 = vmatprep.subr.bf16.mxu0 0
        %1222 = vmatpush1.bf16.msra.mxu0 %v953
        %1223 = vmatprep.subr.bf16.mxu0 0
        %1224 = vmatpush1.bf16.msra.mxu0 %v954
        %1225 = vmatprep.subr.bf16.mxu0 0
        %1226 = vmatpush1.bf16.msra.mxu0 %v955
        %1227 = vmatprep.subr.bf16.mxu0 0
        %1228 = vmatpush1.bf16.msra.mxu0 %v956
        %1229 = vmatprep.subr.bf16.mxu0 0
        %1230 = vmatpush1.bf16.msra.mxu0 %v957
        %1231 = vmatprep.subr.bf16.mxu0 0
        %1232 = vmatpush1.bf16.msra.mxu0 %v958
        %1233 = vmatprep.subr.bf16.mxu0 0
        %1234 = vmatpush1.bf16.msra.mxu0 %v959
        %1235 = vmatprep.subr.bf16.mxu0 0
        %1236 = vmatpush1.bf16.msra.mxu0 %v960
        %1237 = vmatprep.subr.bf16.mxu0 0
        %1238 = vmatpush1.bf16.msra.mxu0 %v961
        %1239 = vmatprep.subr.bf16.mxu0 0
        %1240 = vmatpush1.bf16.msra.mxu0 %v962
        %1241 = vmatprep.subr.bf16.mxu0 0
        %1242 = vmatpush1.bf16.msra.mxu0 %v963
        %1243 = vmatprep.subr.bf16.mxu0 0
        %1244 = vmatpush1.bf16.msra.mxu0 %v964
        %1245 = vmatprep.subr.bf16.mxu0 0
        %1246 = vmatpush1.bf16.msra.mxu0 %v965
        %1247 = vmatprep.subr.bf16.mxu0 0
        %1248 = vmatpush1.bf16.msra.mxu0 %v966
        %1249 = vmatprep.subr.bf16.mxu0 0
        %1250 = vmatpush1.bf16.msra.mxu0 %v967
        %1251 = vmatprep.mubr.bf16.mxu0 %v503
        %1252 = vmatmul.mubr.bf16.gmra.mrb[0].mxu0 %v502
        %v1253 = vpop.f32.mrb[0].mxu0
        %v1254 = vadd.f32 %v1213, %v1253
        %v1255 = vpop.f32.mrb[0].mxu0
        %v1256 = vpop.f32.mrb[0].mxu0
        %v1257 = vadd.f32 %v1216, %v1256
        %v1258 = vpop.f32.mrb[0].mxu0
        %1259 = vdwg.mxu0
        %1260 = vmatprep.subr.bf16.mxu0 0
        %1261 = vmatpush1.bf16.msra.mxu0 %v968
        %1262 = vmatprep.subr.bf16.mxu0 0
        %1263 = vmatpush1.bf16.msra.mxu0 %v969
        %1264 = vmatprep.subr.bf16.mxu0 0
        %1265 = vmatpush1.bf16.msra.mxu0 %v970
        %1266 = vmatprep.subr.bf16.mxu0 0
        %1267 = vmatpush1.bf16.msra.mxu0 %v971
        %1268 = vmatprep.subr.bf16.mxu0 0
        %1269 = vmatpush1.bf16.msra.mxu0 %v972
        %1270 = vmatprep.subr.bf16.mxu0 0
        %1271 = vmatpush1.bf16.msra.mxu0 %v973
        %1272 = vmatprep.subr.bf16.mxu0 0
        %1273 = vmatpush1.bf16.msra.mxu0 %v974
        %1274 = vmatprep.subr.bf16.mxu0 0
        %1275 = vmatpush1.bf16.msra.mxu0 %v975
        %1276 = vmatprep.subr.bf16.mxu0 0
        %1277 = vmatpush1.bf16.msra.mxu0 %v976
        %1278 = vmatprep.subr.bf16.mxu0 0
        %1279 = vmatpush1.bf16.msra.mxu0 %v977
        %1280 = vmatprep.subr.bf16.mxu0 0
        %1281 = vmatpush1.bf16.msra.mxu0 %v978
        %1282 = vmatprep.subr.bf16.mxu0 0
        %1283 = vmatpush1.bf16.msra.mxu0 %v979
        %1284 = vmatprep.subr.bf16.mxu0 0
        %1285 = vmatpush1.bf16.msra.mxu0 %v980
        %1286 = vmatprep.subr.bf16.mxu0 0
        %1287 = vmatpush1.bf16.msra.mxu0 %v981
        %1288 = vmatprep.subr.bf16.mxu0 0
        %1289 = vmatpush1.bf16.msra.mxu0 %v982
        %1290 = vmatprep.subr.bf16.mxu0 0
        %1291 = vmatpush1.bf16.msra.mxu0 %v983
        %1292 = vmatprep.mubr.bf16.mxu0 %v505
        %1293 = vmatmul.mubr.bf16.gmra.mrb[0].mxu0 %v504
        %v1294 = vpop.f32.mrb[0].mxu0
        %v1295 = vadd.f32 %v1254, %v1294
        %v1296 = vpop.f32.mrb[0].mxu0
        %v1297 = vpop.f32.mrb[0].mxu0
        %v1298 = vadd.f32 %v1257, %v1297
        %v1299 = vpop.f32.mrb[0].mxu0
        %1300 = vdwg.mxu0
        %1301 = vmatprep.subr.bf16.mxu0 0
        %1302 = vmatpush1.bf16.msra.mxu0 %v984
        %1303 = vmatprep.subr.bf16.mxu0 0
        %1304 = vmatpush1.bf16.msra.mxu0 %v985
        %1305 = vmatprep.subr.bf16.mxu0 0
        %1306 = vmatpush1.bf16.msra.mxu0 %v986
        %1307 = vmatprep.subr.bf16.mxu0 0
        %1308 = vmatpush1.bf16.msra.mxu0 %v987
        %1309 = vmatprep.subr.bf16.mxu0 0
        %1310 = vmatpush1.bf16.msra.mxu0 %v988
        %1311 = vmatprep.subr.bf16.mxu0 0
        %1312 = vmatpush1.bf16.msra.mxu0 %v989
        %1313 = vmatprep.subr.bf16.mxu0 0
        %1314 = vmatpush1.bf16.msra.mxu0 %v990
        %1315 = vmatprep.subr.bf16.mxu0 0
        %1316 = vmatpush1.bf16.msra.mxu0 %v991
        %1317 = vmatprep.subr.bf16.mxu0 0
        %1318 = vmatpush1.bf16.msra.mxu0 %v992
        %1319 = vmatprep.subr.bf16.mxu0 0
        %1320 = vmatpush1.bf16.msra.mxu0 %v993
        %1321 = vmatprep.subr.bf16.mxu0 0
        %1322 = vmatpush1.bf16.msra.mxu0 %v994
        %1323 = vmatprep.subr.bf16.mxu0 0
        %1324 = vmatpush1.bf16.msra.mxu0 %v995
        %1325 = vmatprep.subr.bf16.mxu0 0
        %1326 = vmatpush1.bf16.msra.mxu0 %v996
        %1327 = vmatprep.subr.bf16.mxu0 0
        %1328 = vmatpush1.bf16.msra.mxu0 %v997
        %1329 = vmatprep.subr.bf16.mxu0 0
        %1330 = vmatpush1.bf16.msra.mxu0 %v998
        %1331 = vmatprep.subr.bf16.mxu0 0
        %1332 = vmatpush1.bf16.msra.mxu0 %v999
        %1333 = vmatprep.mubr.bf16.mxu0 %v507
        %1334 = vmatmul.mubr.bf16.gmra.mrb[0].mxu0 %v506
        %v1335 = vpop.f32.mrb[0].mxu0
        %v1336 = vadd.f32 %v1295, %v1335
        %v1337 = vpop.f32.mrb[0].mxu0
        %v1338 = vpop.f32.mrb[0].mxu0
        %v1339 = vadd.f32 %v1298, %v1338
        %v1340 = vpop.f32.mrb[0].mxu0
        %1341 = vdwg.mxu0
        %v1342 = vmul.f32 %v1336, %v1336
        %v1343 = vmul.f32 %v1339, %v1339
        %v1344 = vld [vmem:[#allocation7] sm:$0xff]
        %v1345 = vld [vmem:[#allocation7 + $0x8] sm:$0xff]
        %v1346 = vld [vmem:[#allocation7 + $0x10] sm:$0xff]
        %v1347 = vld [vmem:[#allocation7 + $0x18] sm:$0xff]
        %v1348 = vld [vmem:[#allocation7 + $0x20] sm:$0xff]
        %v1349 = vld [vmem:[#allocation7 + $0x28] sm:$0xff]
        %v1350 = vld [vmem:[#allocation7 + $0x30] sm:$0xff]
        %v1351 = vld [vmem:[#allocation7 + $0x38] sm:$0xff]
        %v1352 = vld [vmem:[#allocation7 + $0x40] sm:$0xff]
        %v1353 = vld [vmem:[#allocation7 + $0x48] sm:$0xff]
        %v1354 = vld [vmem:[#allocation7 + $0x50] sm:$0xff]
        %v1355 = vld [vmem:[#allocation7 + $0x58] sm:$0xff]
        %v1356 = vld [vmem:[#allocation7 + $0x60] sm:$0xff]
        %v1357 = vld [vmem:[#allocation7 + $0x68] sm:$0xff]
        %v1358 = vld [vmem:[#allocation7 + $0x70] sm:$0xff]
        %v1359 = vld [vmem:[#allocation7 + $0x78] sm:$0xff]
        %1360 = vmatprep.subr.mxu0 0.0
        %1361 = vmatpush1.msra.mxu0 %v1344
        %1362 = vmatprep.subr.mxu0 0.0
        %1363 = vmatpush1.msra.mxu0 %v1345
        %1364 = vmatprep.subr.mxu0 0.0
        %1365 = vmatpush1.msra.mxu0 %v1346
        %1366 = vmatprep.subr.mxu0 0.0
        %1367 = vmatpush1.msra.mxu0 %v1347
        %1368 = vmatprep.subr.mxu0 0.0
        %1369 = vmatpush1.msra.mxu0 %v1348
        %1370 = vmatprep.subr.mxu0 0.0
        %1371 = vmatpush1.msra.mxu0 %v1349
        %1372 = vmatprep.subr.mxu0 0.0
        %1373 = vmatpush1.msra.mxu0 %v1350
        %1374 = vmatprep.subr.mxu0 0.0
        %1375 = vmatpush1.msra.mxu0 %v1351
        %1376 = vmatprep.subr.mxu0 0.0
        %1377 = vmatpush1.msra.mxu0 %v1352
        %1378 = vmatprep.subr.mxu0 0.0
        %1379 = vmatpush1.msra.mxu0 %v1353
        %1380 = vmatprep.subr.mxu0 0.0
        %1381 = vmatpush1.msra.mxu0 %v1354
        %1382 = vmatprep.subr.mxu0 0.0
        %1383 = vmatpush1.msra.mxu0 %v1355
        %1384 = vmatprep.subr.mxu0 0.0
        %1385 = vmatpush1.msra.mxu0 %v1356
        %1386 = vmatprep.subr.mxu0 0.0
        %1387 = vmatpush1.msra.mxu0 %v1357
        %1388 = vmatprep.subr.mxu0 0.0
        %1389 = vmatpush1.msra.mxu0 %v1358
        %1390 = vmatprep.subr.mxu0 0.0
        %1391 = vmatpush1.msra.mxu0 %v1359
        %1392 = vmatprep.subr.mxu0 0.0
        %1393 = vmatpush1.msra.mxu0 0.0
        %1394 = vmatprep.subr.mxu0 0.0
        %1395 = vmatpush1.msra.mxu0 0.0
        %1396 = vmatprep.subr.mxu0 0.0
        %1397 = vmatpush1.msra.mxu0 0.0
        %1398 = vmatprep.subr.mxu0 0.0
        %1399 = vmatpush1.msra.mxu0 0.0
        %1400 = vmatprep.subr.mxu0 0.0
        %1401 = vmatpush1.msra.mxu0 0.0
        %1402 = vmatprep.subr.mxu0 0.0
        %1403 = vmatpush1.msra.mxu0 0.0
        %1404 = vmatprep.subr.mxu0 0.0
        %1405 = vmatpush1.msra.mxu0 0.0
        %1406 = vmatprep.subr.mxu0 0.0
        %1407 = vmatpush1.msra.mxu0 0.0
        %1408 = vmatprep.subr.mxu0 0.0
        %1409 = vmatpush1.msra.mxu0 0.0
        %1410 = vmatprep.subr.mxu0 0.0
        %1411 = vmatpush1.msra.mxu0 0.0
        %1412 = vmatprep.subr.mxu0 0.0
        %1413 = vmatpush1.msra.mxu0 0.0
        %1414 = vmatprep.subr.mxu0 0.0
        %1415 = vmatpush1.msra.mxu0 0.0
        %1416 = vmatprep.subr.mxu0 0.0
        %1417 = vmatpush1.msra.mxu0 0.0
        %1418 = vmatprep.subr.mxu0 0.0
        %1419 = vmatpush1.msra.mxu0 0.0
        %1420 = vmatprep.subr.mxu0 0.0
        %1421 = vmatpush1.msra.mxu0 0.0
        %1422 = vmatprep.subr.mxu0 0.0
        %1423 = vmatpush1.msra.mxu0 0.0
        %1424 = vmatprep.mubr.f32.mxu0 0.0
        %1425 = vmatmul.mubr.f32.gmra.mrb[0].mxu0 %v1342
        %v1426 = vpop.f32.mrb[0].mxu0
        %v1427 = vadd.f32 0.0, %v1426
        %v1428 = vpop.f32.mrb[0].mxu0
        %1429 = vmatprep.mubr.f32.mxu0 0.0
        %1430 = vmatmul.mubr.f32.gmra.mrb[0].mxu0 %v1343
        %v1431 = vpop.f32.mrb[0].mxu0
        %v1432 = vadd.f32 0.0, %v1431
        %v1433 = vpop.f32.mrb[0].mxu0
        %1434 = vdwg.mxu0
        %v1435 = vrsqrt.pop %v1427
        %v1436 = vmul.f32 %v1427, %v1435
        %vm1437 = vcmp.eq.f32.partialorder %v1427, inf
        %v1438 = vsel %vm1437, %v1427, %v1436
        %vm1439 = vcmp.eq.f32.partialorder %v1427, 0.0
        %v1440 = vand.u32 %v1427, 2147483648
        %v1441 = vsel %vm1439, %v1440, %v1438
        %v1442 = vrsqrt.pop %v1432
        %v1443 = vmul.f32 %v1432, %v1442
        %vm1444 = vcmp.eq.f32.partialorder %v1432, inf
        %v1445 = vsel %vm1444, %v1432, %v1443
        %vm1446 = vcmp.eq.f32.partialorder %v1432, 0.0
        %v1447 = vand.u32 %v1432, 2147483648
        %v1448 = vsel %vm1446, %v1447, %v1445
        %v1449 = vmul.f32 %v1336, %v1441
        %v1450 = vmul.f32 %v1339, %v1448
        %v1451 = vadd.f32 %v1427, 1.0
        %v1452 = vadd.f32 %v1432, 1.0
        %v1453 = vrcp.pop %v1451
        %v1454 = vrcp.pop %v1452
        %v1455 = vmul.f32 %v1449, %v1453
        %v1456 = vmul.f32 %v1450, %v1454
        %1457 = vst [vmem:[%s245] sm:$0xff] %v1455
        %1458 = vst [vmem:[%s245 + $0x8] sm:$0xff] %v1456
        %s1459 = sand.u32 %s119, 1
        %s1460 = scalar_lea.sflag [#allocation4], %s1459
        %s1461 = sand.u32 %s119, 1
        %s1462 = smul.addr %s1461, 16
        %s1463 = scalar_lea.vmem [#allocation8], %s1462
        // Predicated region
        $region49: #{tpu_custom_call.1} parent=35 // pred_check
          %p1464 = pneg %p129
        $region50: #{tpu_custom_call.1} parent=35 // pred_check_branch
          %1466 = sbr.rel (%p1464) target = $region52
        $region51: #{tpu_custom_call.1} parent=35 // pred_region
          %s1467 = smul.u32 2, %s22
          %s1469 = ssub.s32 256, 256
          %1470 = vsyncadd %s1460, %s1469
          %s1471 = smul.addr %s1467, 128
          %s1472 = scalar_lea.hbm %s4, %s1471
          %s1473 = sshll.u32 %s1463, 4
          %s1474 = int_to_ptr.vmem [resolvable:$true] %s1473
          %1479 = dma.vmem_to_hbm [thread:$0]  %s1474, 256, %s1472, %s1460, 128, 128, 8
        $region52: #{tpu_custom_call.1} parent=35 // pred_fallthru
          _
      $region36: #{tpu_custom_call.1} parent=5 // pred_fallthru
        _
      %p1480 = scmp.le.s32.totalorder 2, %s17
      // Predicated region
      $region53: #{tpu_custom_call.1} parent=5 // pred_check
        %p1481 = pneg %p1480
      $region54: #{tpu_custom_call.1} parent=5 // pred_check_branch
        %1483 = sbr.rel (%p1481) target = $region56
      $region55: #{tpu_custom_call.1} parent=5 // pred_region
        %s1484 = ssub.s32 %s17, 2
        // Predicated region
        $region57: #{tpu_custom_call.1} parent=55 // pred_check
          %p1485 = pneg %p135
        $region58: #{tpu_custom_call.1} parent=55 // pred_check_branch
          %1487 = sbr.rel (%p1485) target = $region60
        $region59: #{tpu_custom_call.1} parent=55 // pred_region
          %s1488 = sand.u32 %s120, 1
          %s1489 = scalar_lea.sflag [#allocation4], %s1488
          %s1490 = sand.u32 %s120, 1
          %s1491 = smul.addr %s1490, 16
          %s1492 = scalar_lea.vmem [#allocation8], %s1491
          %1493 = dma.done %s1489, 256
        $region60: #{tpu_custom_call.1} parent=55 // pred_fallthru
          _
      $region56: #{tpu_custom_call.1} parent=5 // pred_fallthru
        _
    $region6: #{tpu_custom_call.1} parent=1 // loop_footer
      %s21 = sadd.s32 1, %s17
    $region7: #{tpu_custom_call.1} parent=1 // loop_footer_branch
      %16 = sbr.rel target = $region3
    $region8: #{tpu_custom_call.1} parent=1 // loop_exit
      _
    %1494 = vsyncpa [#allocation3], 1
    %s1495 = scalar_lea.sflag [#allocation3], 1
    %1496 = vsyncpa %s1495, 1
    %1497 = vsyncpa [#allocation6], 1
    %1498 = vsyncpa [#allocation4], 1
    %s1499 = scalar_lea.sflag [#allocation4], 1
    %1500 = vsyncpa %s1499, 1

// kernel: tpu_custom_call.1
$region0: #{tpu_custom_call.1}
  #allocation0 [shape = 'u32[]', space=smem, size = 0x4, offset = 0x4, fixed_abs, tag = 'smem constant byte address 0x4 - core index']
  #allocation1 [shape = 'u32[144,128]{1,0:T(1,128)}', space=vmem, size = 0x12000, scoped, tag = 'internal scratch']
  %s0 = inlined_call_operand.hbm [shape: bf16[32,1536], index: 0, kind: input, shape index: {}]
  %s1 = inlined_call_operand.hbm [shape: bf16[1536,128], index: 1, kind: input, shape index: {}]
  %s2 = inlined_call_operand.vmem [shape: f32[1,128], index: 2, kind: input, shape index: {}]
  %s3 = inlined_call_operand.hbm [shape: f32[128,128], index: 3, kind: input, shape index: {}]
  %s4 = inlined_call_operand.hbm [shape: f32[32,128], index: 4, kind: output, shape index: {}]
  %s5 = sld [smem:[#allocation0]]
  $region61: #{tpu_custom_call.1} parent=0
    _
  %s7 = ssub.s32 1, %s5
  %s8 = scalar_select 0, %s7, %s5
  $region1: #{tpu_custom_call.1} parent=0
    #allocation2 [shape = 'u8[98304]{0}', space=vmem, size = 0x18000, scoped, tag = 'input window, operand 0']
    #allocation3 [shape = 's32[2]{0}', space=sflag, size = 0x8, scoped, tag = 'scoped memory for tpu_custom_call.1']
    #allocation4 [shape = 's32[2]{0}', space=sflag, size = 0x8, scoped, tag = 'scoped memory for tpu_custom_call.1']
    #allocation5 [shape = 'u8[393216]{0}', space=vmem, size = 0x60000, scoped, tag = 'input window, operand 1, single buffered']
    #allocation6 [shape = 's32[1]{0}', space=sflag, size = 0x4, scoped, tag = 'scoped memory for tpu_custom_call.1']
    #allocation7 [shape = 'u8[65536]{0}', space=vmem, size = 0x10000, scoped, tag = 'input window, operand 3, single buffered']
    #allocation8 [shape = 'u8[16384]{0}', space=vmem, size = 0x4000, scoped, tag = 'output window, operand 0']
    %9 = vsyncpa [#allocation3], 0
    %s10 = scalar_lea.sflag [#allocation3], 1
    %11 = vsyncpa %s10, 0
    %12 = vsyncpa [#allocation6], 0
    %13 = vsyncpa [#allocation4], 0
    %s14 = scalar_lea.sflag [#allocation4], 1
    %15 = vsyncpa %s14, 0
    loop: start=0, step=1, limit=4
    $region2: #{tpu_custom_call.1} parent=1 // loop_pre_header
      _
    $region3: #{tpu_custom_call.1} parent=1 // loop_header
      %s17 = sphi 0, %s21
      %p18 = scmp.ge.s32.totalorder %s17, 4
      %s27 = sphi 0, %s29
      %s30 = sphi 0, %s27
      %s31 = sphi 0, %s30
      %s47 = sphi 0, %s31
      %s51 = sphi 0, %s51
      %s53 = sphi 0, %s51
      %s54 = sphi 0, %s53
      %s68 = sphi 0, %s54
      %s72 = sphi 0, %s72
      %s74 = sphi 0, %s72
      %s75 = sphi 0, %s74
      %s89 = sphi 0, %s75
      %s93 = sphi 0, %s93
      %s95 = sphi 0, %s93
      %s96 = sphi 0, %s95
      %s110 = sphi 0, %s96
      %s116 = sphi 0, %s118
      %s119 = sphi 0, %s116
      %s120 = sphi 0, %s119
      %s136 = sphi 0, %s120
    $region4: #{tpu_custom_call.1} parent=1 // loop_header_branch
      %20 = sbr.rel (%p18) target = $region8
    $region5: #{tpu_custom_call.1} parent=1 // loop_body
      %s22 = ssub.s32 %s17, 1
      %s23 = ssub.s32 %s17, 2
      %s24 = sadd.s32 %s17, 1
      %s25 = ssub.s32 %s17, %s24
      %p26 = scmp.eq.s32.totalorder %s25, 0
      %s28 = sadd.s32 %s27, 1
      %s29 = scalar_select %p26, %s27, %s28
      %p32 = pneg %p26
      %p33 = scmp.eq.s32.totalorder %s17, 1
      %p34 = por %p32, %p33
      %p35 = scmp.ne.s32.totalorder %s27, %s30
      %p36 = scmp.eq.s32.totalorder %s17, 0
      %p37 = por %p35, %p36
      %p38 = scmp.ne.s32.totalorder %s27, %s30
      %p39 = scmp.eq.s32.totalorder %s22, 1
      %p40 = por %p38, %p39
      %p41 = scmp.ne.s32.totalorder %s30, %s31
      %p42 = scmp.eq.s32.totalorder %s22, 0
      %p43 = por %p41, %p42
      %p44 = scmp.ne.s32.totalorder %s30, %s31
      %p45 = scmp.eq.s32.totalorder %s23, 1
      %p46 = por %p44, %p45
      %p48 = scmp.ne.s32.totalorder %s31, %s47
      %p49 = scmp.eq.s32.totalorder %s23, 0
      %p50 = por %p48, %p49
      %s52 = sadd.s32 %s51, 1
      %p55 = scmp.eq.s32.totalorder %s17, 1
      %p56 = scmp.ne.s32.totalorder %s51, %s53
      %p57 = scmp.eq.s32.totalorder %s17, 0
      %p58 = por %p56, %p57
      %p59 = scmp.ne.s32.totalorder %s51, %s53
      %p60 = scmp.eq.s32.totalorder %s22, 1
      %p61 = por %p59, %p60
      %p62 = scmp.ne.s32.totalorder %s53, %s54
      %p63 = scmp.eq.s32.totalorder %s22, 0
      %p64 = por %p62, %p63
      %p65 = scmp.ne.s32.totalorder %s53, %s54
      %p66 = scmp.eq.s32.totalorder %s23, 1
      %p67 = por %p65, %p66
      %p69 = scmp.ne.s32.totalorder %s54, %s68
      %p70 = scmp.eq.s32.totalorder %s23, 0
      %p71 = por %p69, %p70
      %s73 = sadd.s32 %s72, 1
      %p76 = scmp.eq.s32.totalorder %s17, 1
      %p77 = scmp.ne.s32.totalorder %s72, %s74
      %p78 = scmp.eq.s32.totalorder %s17, 0
      %p79 = por %p77, %p78
      %p80 = scmp.ne.s32.totalorder %s72, %s74
      %p81 = scmp.eq.s32.totalorder %s22, 1
      %p82 = por %p80, %p81
      %p83 = scmp.ne.s32.totalorder %s74, %s75
      %p84 = scmp.eq.s32.totalorder %s22, 0
      %p85 = por %p83, %p84
      %p86 = scmp.ne.s32.totalorder %s74, %s75
      %p87 = scmp.eq.s32.totalorder %s23, 1
      %p88 = por %p86, %p87
      %p90 = scmp.ne.s32.totalorder %s75, %s89
      %p91 = scmp.eq.s32.totalorder %s23, 0
      %p92 = por %p90, %p91
      %s94 = sadd.s32 %s93, 1
      %p97 = scmp.eq.s32.totalorder %s17, 1
      %p98 = scmp.ne.s32.totalorder %s93, %s95
      %p99 = scmp.eq.s32.totalorder %s17, 0
      %p100 = por %p98, %p99
      %p101 = scmp.ne.s32.totalorder %s93, %s95
      %p102 = scmp.eq.s32.totalorder %s22, 1
      %p103 = por %p101, %p102
      %p104 = scmp.ne.s32.totalorder %s95, %s96
      %p105 = scmp.eq.s32.totalorder %s22, 0
      %p106 = por %p104, %p105
      %p107 = scmp.ne.s32.totalorder %s95, %s96
      %p108 = scmp.eq.s32.totalorder %s23, 1
      %p109 = por %p107, %p108
      %p111 = scmp.ne.s32.totalorder %s96, %s110
      %p112 = scmp.eq.s32.totalorder %s23, 0
      %p113 = por %p111, %p112
      %s114 = ssub.s32 %s17, %s24
      %p115 = scmp.eq.s32.totalorder %s114, 0
      %s117 = sadd.s32 %s116, 1
      %s118 = scalar_select %p115, %s116, %s117
      %p121 = pneg %p115
      %p122 = scmp.eq.s32.totalorder %s17, 1
      %p123 = por %p121, %p122
      %p124 = scmp.ne.s32.totalorder %s116, %s119
      %p125 = scmp.eq.s32.totalorder %s17, 0
      %p126 = por %p124, %p125
      %p127 = scmp.ne.s32.totalorder %s116, %s119
      %p128 = scmp.eq.s32.totalorder %s22, 1
      %p129 = por %p127, %p128
      %p130 = scmp.ne.s32.totalorder %s119, %s120
      %p131 = scmp.eq.s32.totalorder %s22, 0
      %p132 = por %p130, %p131
      %p133 = scmp.ne.s32.totalorder %s119, %s120
      %p134 = scmp.eq.s32.totalorder %s23, 1
      %p135 = por %p133, %p134
      %p137 = scmp.ne.s32.totalorder %s120, %s136
      %p138 = scmp.eq.s32.totalorder %s23, 0
      %p139 = por %p137, %p138
      %p140 = scmp.le.s32.totalorder 1, %s17
      %p141 = scmp.lt.s32.totalorder %s17, 3
      %p142 = pnand %p140, %p141
      %p143 = pneg %p142
      // Predicated region
      $region9: #{tpu_custom_call.1} parent=5 // pred_check
        _
      $region10: #{tpu_custom_call.1} parent=5 // pred_check_branch
        %145 = sbr.rel (%p142) target = $region12
      $region11: #{tpu_custom_call.1} parent=5 // pred_region
        %s146 = ssub.s32 %s17, 1
        // Predicated region
        $region13: #{tpu_custom_call.1} parent=11 // pred_check
          %p147 = pneg %p64
        $region14: #{tpu_custom_call.1} parent=11 // pred_check_branch
          %149 = sbr.rel (%p147) target = $region16
        $region15: #{tpu_custom_call.1} parent=11 // pred_region
          %s151 = ssub.s32 12288, 12288
          %152 = vsyncadd [#allocation6], %s151
          %s153 = sshll.u32 [#allocation5], 4
          %s154 = int_to_ptr.vmem [resolvable:$true] %s153
          %159 = dma.hbm_to_vmem [thread:$0]  %s1, 12288, %s154, [#allocation6], 64, 64, 4
        $region16: #{tpu_custom_call.1} parent=11 // pred_fallthru
          _
        // Predicated region
        $region17: #{tpu_custom_call.1} parent=11 // pred_check
          %p160 = pneg %p85
        $region18: #{tpu_custom_call.1} parent=11 // pred_check_branch
          %162 = sbr.rel (%p160) target = $region20
        $region19: #{tpu_custom_call.1} parent=11 // pred_region
          _
        $region20: #{tpu_custom_call.1} parent=11 // pred_fallthru
          _
        // Predicated region
        $region21: #{tpu_custom_call.1} parent=11 // pred_check
          %p163 = pneg %p106
        $region22: #{tpu_custom_call.1} parent=11 // pred_check_branch
          %165 = sbr.rel (%p163) target = $region24
        $region23: #{tpu_custom_call.1} parent=11 // pred_region
          %s167 = ssub.s32 2048, 2048
          %168 = vsyncadd [#allocation6], %s167
          %s169 = sshll.u32 [#allocation7], 4
          %s170 = int_to_ptr.vmem [resolvable:$true] %s169
          %175 = dma.hbm_to_vmem [thread:$0]  %s3, 2048, %s170, [#allocation6], 128, 128, 8
        $region24: #{tpu_custom_call.1} parent=11 // pred_fallthru
          _
      $region12: #{tpu_custom_call.1} parent=5 // pred_fallthru
        _
      %p176 = scmp.lt.s32.totalorder %s17, 2
      // Predicated region
      $region25: #{tpu_custom_call.1} parent=5 // pred_check
        %p177 = pneg %p176
      $region26: #{tpu_custom_call.1} parent=5 // pred_check_branch
        %179 = sbr.rel (%p177) target = $region28
      $region27: #{tpu_custom_call.1} parent=5 // pred_region
        // Predicated region
        $region29: #{tpu_custom_call.1} parent=27 // pred_check
          %p180 = pneg %p37
        $region30: #{tpu_custom_call.1} parent=27 // pred_check_branch
          %182 = sbr.rel (%p180) target = $region32
        $region31: #{tpu_custom_call.1} parent=27 // pred_region
          %s183 = sand.u32 %s27, 1
          %s184 = scalar_lea.sflag [#allocation3], %s183
          %s185 = sand.u32 %s27, 1
          %s186 = smul.addr %s185, 96
          %s187 = scalar_lea.vmem [#allocation2], %s186
          %s188 = smul.u32 2, %s17
          %s190 = ssub.s32 1536, 1536
          %191 = vsyncadd %s184, %s190
          %s192 = smul.addr %s188, 12
          %s193 = smul.addr %s192, 64
          %s194 = scalar_lea.hbm %s0, %s193
          %s195 = sshll.u32 %s187, 4
          %s196 = int_to_ptr.vmem [resolvable:$true] %s195
          %201 = dma.hbm_to_vmem [thread:$0]  %s194, 1536, %s196, %s184, 768, 768, 48
        $region32: #{tpu_custom_call.1} parent=27 // pred_fallthru
          _
      $region28: #{tpu_custom_call.1} parent=5 // pred_fallthru
        _
      %p202 = scmp.le.s32.totalorder 1, %s17
      %p203 = scmp.lt.s32.totalorder %s17, 3
      %p204 = pnand %p202, %p203
      %p205 = pneg %p204
      // Predicated region
      $region33: #{tpu_custom_call.1} parent=5 // pred_check
        _
      $region34: #{tpu_custom_call.1} parent=5 // pred_check_branch
        %207 = sbr.rel (%p204) target = $region36
      $region35: #{tpu_custom_call.1} parent=5 // pred_region
        %s208 = ssub.s32 %s17, 1
        %s209 = sand.u32 %s30, 1
        %s210 = scalar_lea.sflag [#allocation3], %s209
        %s211 = sand.u32 %s30, 1
        %s212 = smul.addr %s211, 96
        %s213 = scalar_lea.vmem [#allocation2], %s212
        // Predicated region
        $region37: #{tpu_custom_call.1} parent=35 // pred_check
          %p214 = pneg %p43
        $region38: #{tpu_custom_call.1} parent=35 // pred_check_branch
          %216 = sbr.rel (%p214) target = $region40
        $region39: #{tpu_custom_call.1} parent=35 // pred_region
          %217 = dma.done %s210, 1536
        $region40: #{tpu_custom_call.1} parent=35 // pred_fallthru
          _
        // Predicated region
        $region41: #{tpu_custom_call.1} parent=35 // pred_check
          %p218 = pneg %p64
        $region42: #{tpu_custom_call.1} parent=35 // pred_check_branch
          %220 = sbr.rel (%p218) target = $region44
        $region43: #{tpu_custom_call.1} parent=35 // pred_region
          %221 = dma.done [#allocation6], 12288
        $region44: #{tpu_custom_call.1} parent=35 // pred_fallthru
          _
        // Predicated region
        $region45: #{tpu_custom_call.1} parent=35 // pred_check
          %p222 = pneg %p106
        $region46: #{tpu_custom_call.1} parent=35 // pred_check_branch
          %224 = sbr.rel (%p222) target = $region48
        $region47: #{tpu_custom_call.1} parent=35 // pred_region
          %225 = dma.done [#allocation6], 2048
        $region48: #{tpu_custom_call.1} parent=35 // pred_fallthru
          _
        %s226 = sand.u32 %s30, 1
        %s227 = scalar_lea.sflag [#allocation3], %s226
        %s228 = sand.u32 %s30, 1
        %s229 = smul.addr %s228, 96
        %s230 = scalar_lea.vmem [#allocation2], %s229
        %p231 = pneg %p43
        %p232 = pneg %p40
        %p233 = pneg %p64
        %p234 = pneg %p61
        %p235 = pneg %p85
        %p236 = pneg %p82
        %p237 = pneg %p106
        %p238 = pneg %p103
        %p239 = pneg %p132
        %p240 = pneg %p129
        %s241 = sand.u32 %s119, 1
        %s242 = scalar_lea.sflag [#allocation4], %s241
        %s243 = sand.u32 %s119, 1
        %s244 = smul.addr %s243, 16
        %s245 = scalar_lea.vmem [#allocation8], %s244
        %s246 = smul.u32 2, %s22
        %s247 = smul.u32 2, %s22
        %v249 = vld [vmem:[%s213] sm:$0xff]
        %v250 = vld [vmem:[%s213 + $0x8] sm:$0xff]
        %v251 = vld [vmem:[%s213 + $0x10] sm:$0xff]
        %v252 = vld [vmem:[%s213 + $0x18] sm:$0xff]
        %v253 = vld [vmem:[%s213 + $0x20] sm:$0xff]
        %v254 = vld [vmem:[%s213 + $0x28] sm:$0xff]
        %v255 = vld [vmem:[%s213 + $0x30] sm:$0xff]
        %v256 = vld [vmem:[%s213 + $0x38] sm:$0xff]
        %v257 = vld [vmem:[%s213 + $0x40] sm:$0xff]
        %v258 = vld [vmem:[%s213 + $0x48] sm:$0xff]
        %v259 = vld [vmem:[%s213 + $0x50] sm:$0xff]
        %v260 = vld [vmem:[%s213 + $0x58] sm:$0xff]
        %v261 = vld [vmem:[#allocation5] sm:$0xf]
        %v262 = vld [vmem:[#allocation5 + $0x4] sm:$0xf]
        %v263 = vld [vmem:[#allocation5 + $0x8] sm:$0xf]
        %v264 = vld [vmem:[#allocation5 + $0xc] sm:$0xf]
        %v265 = vld [vmem:[#allocation5 + $0x10] sm:$0xf]
        %v266 = vld [vmem:[#allocation5 + $0x14] sm:$0xf]
        %v267 = vld [vmem:[#allocation5 + $0x18] sm:$0xf]
        %v268 = vld [vmem:[#allocation5 + $0x1c] sm:$0xf]
        %v269 = vld [vmem:[#allocation5 + $0x20] sm:$0xf]
        %v270 = vld [vmem:[#allocation5 + $0x24] sm:$0xf]
        %v271 = vld [vmem:[#allocation5 + $0x28] sm:$0xf]
        %v272 = vld [vmem:[#allocation5 + $0x2c] sm:$0xf]
        %v273 = vld [vmem:[#allocation5 + $0x30] sm:$0xf]
        %v274 = vld [vmem:[#allocation5 + $0x34] sm:$0xf]
        %v275 = vld [vmem:[#allocation5 + $0x38] sm:$0xf]
        %v276 = vld [vmem:[#allocation5 + $0x3c] sm:$0xf]
        %v277 = vld [vmem:[#allocation5 + $0x40] sm:$0xf]
        %v278 = vld [vmem:[#allocation5 + $0x44] sm:$0xf]
        %v279 = vld [vmem:[#allocation5 + $0x48] sm:$0xf]
        %v280 = vld [vmem:[#allocation5 + $0x4c] sm:$0xf]
        %v281 = vld [vmem:[#allocation5 + $0x50] sm:$0xf]
        %v282 = vld [vmem:[#allocation5 + $0x54] sm:$0xf]
        %v283 = vld [vmem:[#allocation5 + $0x58] sm:$0xf]
        %v284 = vld [vmem:[#allocation5 + $0x5c] sm:$0xf]
        %v285 = vld [vmem:[#allocation5 + $0x60] sm:$0xf]
        %v286 = vld [vmem:[#allocation5 + $0x64] sm:$0xf]
        %v287 = vld [vmem:[#allocation5 + $0x68] sm:$0xf]
        %v288 = vld [vmem:[#allocation5 + $0x6c] sm:$0xf]
        %v289 = vld [vmem:[#allocation5 + $0x70] sm:$0xf]
        %v290 = vld [vmem:[#allocation5 + $0x74] sm:$0xf]
        %v291 = vld [vmem:[#allocation5 + $0x78] sm:$0xf]
        %v292 = vld [vmem:[#allocation5 + $0x7c] sm:$0xf]
        %v293 = vld [vmem:[#allocation5 + $0x80] sm:$0xf]
        %v294 = vld [vmem:[#allocation5 + $0x84] sm:$0xf]
        %v295 = vld [vmem:[#allocation5 + $0x88] sm:$0xf]
        %v296 = vld [vmem:[#allocation5 + $0x8c] sm:$0xf]
        %v297 = vld [vmem:[#allocation5 + $0x90] sm:$0xf]
        %v298 = vld [vmem:[#allocation5 + $0x94] sm:$0xf]
        %v299 = vld [vmem:[#allocation5 + $0x98] sm:$0xf]
        %v300 = vld [vmem:[#allocation5 + $0x9c] sm:$0xf]
        %v301 = vld [vmem:[#allocation5 + $0xa0] sm:$0xf]
        %v302 = vld [vmem:[#allocation5 + $0xa4] sm:$0xf]
        %v303 = vld [vmem:[#allocation5 + $0xa8] sm:$0xf]
        %v304 = vld [vmem:[#allocation5 + $0xac] sm:$0xf]
        %v305 = vld [vmem:[#allocation5 + $0xb0] sm:$0xf]
        %v306 = vld [vmem:[#allocation5 + $0xb4] sm:$0xf]
        %v307 = vld [vmem:[#allocation5 + $0xb8] sm:$0xf]
        %v308 = vld [vmem:[#allocation5 + $0xbc] sm:$0xf]
        %v309 = vld [vmem:[#allocation5 + $0xc0] sm:$0xf]
        %v310 = vld [vmem:[#allocation5 + $0xc4] sm:$0xf]
        %v311 = vld [vmem:[#allocation5 + $0xc8] sm:$0xf]
        %v312 = vld [vmem:[#allocation5 + $0xcc] sm:$0xf]
        %v313 = vld [vmem:[#allocation5 + $0xd0] sm:$0xf]
        %v314 = vld [vmem:[#allocation5 + $0xd4] sm:$0xf]
        %v315 = vld [vmem:[#allocation5 + $0xd8] sm:$0xf]
        %v316 = vld [vmem:[#allocation5 + $0xdc] sm:$0xf]
        %v317 = vld [vmem:[#allocation5 + $0xe0] sm:$0xf]
        %v318 = vld [vmem:[#allocation5 + $0xe4] sm:$0xf]
        %v319 = vld [vmem:[#allocation5 + $0xe8] sm:$0xf]
        %v320 = vld [vmem:[#allocation5 + $0xec] sm:$0xf]
        %v321 = vld [vmem:[#allocation5 + $0xf0] sm:$0xf]
        %v322 = vld [vmem:[#allocation5 + $0xf4] sm:$0xf]
        %v323 = vld [vmem:[#allocation5 + $0xf8] sm:$0xf]
        %v324 = vld [vmem:[#allocation5 + $0xfc] sm:$0xf]
        %v325 = vld [vmem:[#allocation5 + $0x100] sm:$0xf]
        %v326 = vld [vmem:[#allocation5 + $0x104] sm:$0xf]
        %v327 = vld [vmem:[#allocation5 + $0x108] sm:$0xf]
        %v328 = vld [vmem:[#allocation5 + $0x10c] sm:$0xf]
        %v329 = vld [vmem:[#allocation5 + $0x110] sm:$0xf]
        %v330 = vld [vmem:[#allocation5 + $0x114] sm:$0xf]
        %v331 = vld [vmem:[#allocation5 + $0x118] sm:$0xf]
        %v332 = vld [vmem:[#allocation5 + $0x11c] sm:$0xf]
        %v333 = vld [vmem:[#allocation5 + $0x120] sm:$0xf]
        %v334 = vld [vmem:[#allocation5 + $0x124] sm:$0xf]
        %v335 = vld [vmem:[#allocation5 + $0x128] sm:$0xf]
        %v336 = vld [vmem:[#allocation5 + $0x12c] sm:$0xf]
        %v337 = vld [vmem:[#allocation5 + $0x130] sm:$0xf]
        %v338 = vld [vmem:[#allocation5 + $0x134] sm:$0xf]
        %v339 = vld [vmem:[#allocation5 + $0x138] sm:$0xf]
        %v340 = vld [vmem:[#allocation5 + $0x13c] sm:$0xf]
        %v341 = vld [vmem:[#allocation5 + $0x140] sm:$0xf]
        %v342 = vld [vmem:[#allocation5 + $0x144] sm:$0xf]
        %v343 = vld [vmem:[#allocation5 + $0x148] sm:$0xf]
        %v344 = vld [vmem:[#allocation5 + $0x14c] sm:$0xf]
        %v345 = vld [vmem:[#allocation5 + $0x150] sm:$0xf]
        %v346 = vld [vmem:[#allocation5 + $0x154] sm:$0xf]
        %v347 = vld [vmem:[#allocation5 + $0x158] sm:$0xf]
        %v348 = vld [vmem:[#allocation5 + $0x15c] sm:$0xf]
        %v349 = vld [vmem:[#allocation5 + $0x160] sm:$0xf]
        %v350 = vld [vmem:[#allocation5 + $0x164] sm:$0xf]
        %v351 = vld [vmem:[#allocation5 + $0x168] sm:$0xf]
        %v352 = vld [vmem:[#allocation5 + $0x16c] sm:$0xf]
        %v353 = vld [vmem:[#allocation5 + $0x170] sm:$0xf]
        %v354 = vld [vmem:[#allocation5 + $0x174] sm:$0xf]
        %v355 = vld [vmem:[#allocation5 + $0x178] sm:$0xf]
        %v356 = vld [vmem:[#allocation5 + $0x17c] sm:$0xf]
        %v357 = vld [vmem:[#allocation5 + $0x180] sm:$0xf]
        %v358 = vld [vmem:[#allocation5 + $0x184] sm:$0xf]
        %v359 = vld [vmem:[#allocation5 + $0x188] sm:$0xf]
        %v360 = vld [vmem:[#allocation5 + $0x18c] sm:$0xf]
        %v361 = vld [vmem:[#allocation5 + $0x190] sm:$0xf]
        %v362 = vld [vmem:[#allocation5 + $0x194] sm:$0xf]
        %v363 = vld [vmem:[#allocation5 + $0x198] sm:$0xf]
        %v364 = vld [vmem:[#allocation5 + $0x19c] sm:$0xf]
        %v365 = vld [vmem:[#allocation5 + $0x1a0] sm:$0xf]
        %v366 = vld [vmem:[#allocation5 + $0x1a4] sm:$0xf]
        %v367 = vld [vmem:[#allocation5 + $0x1a8] sm:$0xf]
        %v368 = vld [vmem:[#allocation5 + $0x1ac] sm:$0xf]
        %v369 = vld [vmem:[#allocation5 + $0x1b0] sm:$0xf]
        %v370 = vld [vmem:[#allocation5 + $0x1b4] sm:$0xf]
        %v371 = vld [vmem:[#allocation5 + $0x1b8] sm:$0xf]
        %v372 = vld [vmem:[#allocation5 + $0x1bc] sm:$0xf]
        %v373 = vld [vmem:[#allocation5 + $0x1c0] sm:$0xf]
        %v374 = vld [vmem:[#allocation5 + $0x1c4] sm:$0xf]
        %v375 = vld [vmem:[#allocation5 + $0x1c8] sm:$0xf]
        %v376 = vld [vmem:[#allocation5 + $0x1cc] sm:$0xf]
        %v377 = vld [vmem:[#allocation5 + $0x1d0] sm:$0xf]
        %v378 = vld [vmem:[#allocation5 + $0x1d4] sm:$0xf]
        %v379 = vld [vmem:[#allocation5 + $0x1d8] sm:$0xf]
        %v380 = vld [vmem:[#allocation5 + $0x1dc] sm:$0xf]
        %v381 = vld [vmem:[#allocation5 + $0x1e0] sm:$0xf]
        %v382 = vld [vmem:[#allocation5 + $0x1e4] sm:$0xf]
        %v383 = vld [vmem:[#allocation5 + $0x1e8] sm:$0xf]
        %v384 = vld [vmem:[#allocation5 + $0x1ec] sm:$0xf]
        %v385 = vld [vmem:[#allocation5 + $0x1f0] sm:$0xf]
        %v386 = vld [vmem:[#allocation5 + $0x1f4] sm:$0xf]
        %v387 = vld [vmem:[#allocation5 + $0x1f8] sm:$0xf]
        %v388 = vld [vmem:[#allocation5 + $0x1fc] sm:$0xf]
        %v389 = vld [vmem:[#allocation5 + $0x200] sm:$0xf]
        %v390 = vld [vmem:[#allocation5 + $0x204] sm:$0xf]
        %v391 = vld [vmem:[#allocation5 + $0x208] sm:$0xf]
        %v392 = vld [vmem:[#allocation5 + $0x20c] sm:$0xf]
        %v393 = vld [vmem:[#allocation5 + $0x210] sm:$0xf]
        %v394 = vld [vmem:[#allocation5 + $0x214] sm:$0xf]
        %v395 = vld [vmem:[#allocation5 + $0x218] sm:$0xf]
        %v396 = vld [vmem:[#allocation5 + $0x21c] sm:$0xf]
        %v397 = vld [vmem:[#allocation5 + $0x220] sm:$0xf]
        %v398 = vld [vmem:[#allocation5 + $0x224] sm:$0xf]
        %v399 = vld [vmem:[#allocation5 + $0x228] sm:$0xf]
        %v400 = vld [vmem:[#allocation5 + $0x22c] sm:$0xf]
        %v401 = vld [vmem:[#allocation5 + $0x230] sm:$0xf]
        %v402 = vld [vmem:[#allocation5 + $0x234] sm:$0xf]
        %v403 = vld [vmem:[#allocation5 + $0x238] sm:$0xf]
        %v404 = vld [vmem:[#allocation5 + $0x23c] sm:$0xf]
        %v405 = vld [vmem:[#allocation5 + $0x240] sm:$0xf]
        %v406 = vld [vmem:[#allocation5 + $0x244] sm:$0xf]
        %v407 = vld [vmem:[#allocation5 + $0x248] sm:$0xf]
        %v408 = vld [vmem:[#allocation5 + $0x24c] sm:$0xf]
        %v409 = vld [vmem:[#allocation5 + $0x250] sm:$0xf]
        %v410 = vld [vmem:[#allocation5 + $0x254] sm:$0xf]
        %v411 = vld [vmem:[#allocation5 + $0x258] sm:$0xf]
        %v412 = vld [vmem:[#allocation5 + $0x25c] sm:$0xf]
        %v413 = vld [vmem:[#allocation5 + $0x260] sm:$0xf]
        %v414 = vld [vmem:[#allocation5 + $0x264] sm:$0xf]
        %v415 = vld [vmem:[#allocation5 + $0x268] sm:$0xf]
        %v416 = vld [vmem:[#allocation5 + $0x26c] sm:$0xf]
        %v417 = vld [vmem:[#allocation5 + $0x270] sm:$0xf]
        %v418 = vld [vmem:[#allocation5 + $0x274] sm:$0xf]
        %v419 = vld [vmem:[#allocation5 + $0x278] sm:$0xf]
        %v420 = vld [vmem:[#allocation5 + $0x27c] sm:$0xf]
        %v421 = vld [vmem:[#allocation5 + $0x280] sm:$0xf]
        %v422 = vld [vmem:[#allocation5 + $0x284] sm:$0xf]
        %v423 = vld [vmem:[#allocation5 + $0x288] sm:$0xf]
        %v424 = vld [vmem:[#allocation5 + $0x28c] sm:$0xf]
        %v425 = vld [vmem:[#allocation5 + $0x290] sm:$0xf]
        %v426 = vld [vmem:[#allocation5 + $0x294] sm:$0xf]
        %v427 = vld [vmem:[#allocation5 + $0x298] sm:$0xf]
        %v428 = vld [vmem:[#allocation5 + $0x29c] sm:$0xf]
        %v429 = vld [vmem:[#allocation5 + $0x2a0] sm:$0xf]
        %v430 = vld [vmem:[#allocation5 + $0x2a4] sm:$0xf]
        %v431 = vld [vmem:[#allocation5 + $0x2a8] sm:$0xf]
        %v432 = vld [vmem:[#allocation5 + $0x2ac] sm:$0xf]
        %v433 = vld [vmem:[#allocation5 + $0x2b0] sm:$0xf]
        %v434 = vld [vmem:[#allocation5 + $0x2b4] sm:$0xf]
        %v435 = vld [vmem:[#allocation5 + $0x2b8] sm:$0xf]
        %v436 = vld [vmem:[#allocation5 + $0x2bc] sm:$0xf]
        %v437 = vld [vmem:[#allocation5 + $0x2c0] sm:$0xf]
        %v438 = vld [vmem:[#allocation5 + $0x2c4] sm:$0xf]
        %v439 = vld [vmem:[#allocation5 + $0x2c8] sm:$0xf]
        %v440 = vld [vmem:[#allocation5 + $0x2cc] sm:$0xf]
        %v441 = vld [vmem:[#allocation5 + $0x2d0] sm:$0xf]
        %v442 = vld [vmem:[#allocation5 + $0x2d4] sm:$0xf]
        %v443 = vld [vmem:[#allocation5 + $0x2d8] sm:$0xf]
        %v444 = vld [vmem:[#allocation5 + $0x2dc] sm:$0xf]
        %v445 = vld [vmem:[#allocation5 + $0x2e0] sm:$0xf]
        %v446 = vld [vmem:[#allocation5 + $0x2e4] sm:$0xf]
        %v447 = vld [vmem:[#allocation5 + $0x2e8] sm:$0xf]
        %v448 = vld [vmem:[#allocation5 + $0x2ec] sm:$0xf]
        %v449 = vld [vmem:[#allocation5 + $0x2f0] sm:$0xf]
        %v450 = vld [vmem:[#allocation5 + $0x2f4] sm:$0xf]
        %v451 = vld [vmem:[#allocation5 + $0x2f8] sm:$0xf]
        %v452 = vld [vmem:[#allocation5 + $0x2fc] sm:$0xf]
        %v453 = vld [vmem:[%s2] sm:$0x1]
        %v455 = vlaneseq
        %v456 = vshrl.u32 %v455, 7
        %v457 = vsub.s32 0, %v456
        %v458 = vrot.slane %v453, %v457
        %v472 = vunpack.c.l.b16 %v249
        %v473 = vunpack.c.h.b16 %v249
        %v474 = vunpack.c.l.b16 %v250
        %v475 = vunpack.c.h.b16 %v250
        %v476 = vunpack.c.l.b16 %v251
        %v477 = vunpack.c.h.b16 %v251
        %v478 = vunpack.c.l.b16 %v252
        %v479 = vunpack.c.h.b16 %v252
        %v480 = vunpack.c.l.b16 %v253
        %v481 = vunpack.c.h.b16 %v253
        %v482 = vunpack.c.l.b16 %v254
        %v483 = vunpack.c.h.b16 %v254
        %v484 = vunpack.c.l.b16 %v255
        %v485 = vunpack.c.h.b16 %v255
        %v486 = vunpack.c.l.b16 %v256
        %v487 = vunpack.c.h.b16 %v256
        %v488 = vunpack.c.l.b16 %v257
        %v489 = vunpack.c.h.b16 %v257
        %v490 = vunpack.c.l.b16 %v258
        %v491 = vunpack.c.h.b16 %v258
        %v492 = vunpack.c.l.b16 %v259
        %v493 = vunpack.c.h.b16 %v259
        %v494 = vunpack.c.l.b16 %v260
        %v495 = vunpack.c.h.b16 %v260
        %v496 = vpack.c.b16 %v484, %v472
        %v497 = vpack.c.b16 %v485, %v473
        %v498 = vpack.c.b16 %v486, %v474
        %v499 = vpack.c.b16 %v487, %v475
        %v500 = vpack.c.b16 %v488, %v476
        %v501 = vpack.c.b16 %v489, %v477
        %v502 = vpack.c.b16 %v490, %v478
        %v503 = vpack.c.b16 %v491, %v479
        %v504 = vpack.c.b16 %v492, %v480
        %v505 = vpack.c.b16 %v493, %v481
        %v506 = vpack.c.b16 %v494, %v482
        %v507 = vpack.c.b16 %v495, %v483
        %v712 = vunpack.c.l.b16 %v261
        %v713 = vunpack.c.l.b16 %v262
        %v714 = vunpack.c.l.b16 %v263
        %v715 = vunpack.c.l.b16 %v264
        %v716 = vunpack.c.l.b16 %v265
        %v717 = vunpack.c.l.b16 %v266
        %v718 = vunpack.c.l.b16 %v267
        %v719 = vunpack.c.l.b16 %v268
        %v720 = vunpack.c.l.b16 %v269
        %v721 = vunpack.c.l.b16 %v270
        %v722 = vunpack.c.l.b16 %v271
        %v723 = vunpack.c.l.b16 %v272
        %v724 = vunpack.c.l.b16 %v273
        %v725 = vunpack.c.l.b16 %v274
        %v726 = vunpack.c.l.b16 %v275
        %v727 = vunpack.c.l.b16 %v276
        %v728 = vunpack.c.l.b16 %v277
        %v729 = vunpack.c.l.b16 %v278
        %v730 = vunpack.c.l.b16 %v279
        %v731 = vunpack.c.l.b16 %v280
        %v732 = vunpack.c.l.b16 %v281
        %v733 = vunpack.c.l.b16 %v282
        %v734 = vunpack.c.l.b16 %v283
        %v735 = vunpack.c.l.b16 %v284
        %v736 = vunpack.c.l.b16 %v285
        %v737 = vunpack.c.l.b16 %v286
        %v738 = vunpack.c.l.b16 %v287
        %v739 = vunpack.c.l.b16 %v288
        %v740 = vunpack.c.l.b16 %v289
        %v741 = vunpack.c.l.b16 %v290
        %v742 = vunpack.c.l.b16 %v291
        %v743 = vunpack.c.l.b16 %v292
        %v744 = vunpack.c.l.b16 %v293
        %v745 = vunpack.c.l.b16 %v294
        %v746 = vunpack.c.l.b16 %v295
        %v747 = vunpack.c.l.b16 %v296
        %v748 = vunpack.c.l.b16 %v297
        %v749 = vunpack.c.l.b16 %v298
        %v750 = vunpack.c.l.b16 %v299
        %v751 = vunpack.c.l.b16 %v300
        %v752 = vunpack.c.l.b16 %v301
        %v753 = vunpack.c.l.b16 %v302
        %v754 = vunpack.c.l.b16 %v303
        %v755 = vunpack.c.l.b16 %v304
        %v756 = vunpack.c.l.b16 %v305
        %v757 = vunpack.c.l.b16 %v306
        %v758 = vunpack.c.l.b16 %v307
        %v759 = vunpack.c.l.b16 %v308
        %v760 = vunpack.c.l.b16 %v309
        %v761 = vunpack.c.l.b16 %v310
        %v762 = vunpack.c.l.b16 %v311
        %v763 = vunpack.c.l.b16 %v312
        %v764 = vunpack.c.l.b16 %v313
        %v765 = vunpack.c.l.b16 %v314
        %v766 = vunpack.c.l.b16 %v315
        %v767 = vunpack.c.l.b16 %v316
        %v768 = vunpack.c.l.b16 %v317
        %v769 = vunpack.c.l.b16 %v318
        %v770 = vunpack.c.l.b16 %v319
        %v771 = vunpack.c.l.b16 %v320
        %v772 = vunpack.c.l.b16 %v321
        %v773 = vunpack.c.l.b16 %v322
        %v774 = vunpack.c.l.b16 %v323
        %v775 = vunpack.c.l.b16 %v324
        %v776 = vunpack.c.l.b16 %v325
        %v777 = vunpack.c.l.b16 %v326
        %v778 = vunpack.c.l.b16 %v327
        %v779 = vunpack.c.l.b16 %v328
        %v780 = vunpack.c.l.b16 %v329
        %v781 = vunpack.c.l.b16 %v330
        %v782 = vunpack.c.l.b16 %v331
        %v783 = vunpack.c.l.b16 %v332
        %v784 = vunpack.c.l.b16 %v333
        %v785 = vunpack.c.l.b16 %v334
        %v786 = vunpack.c.l.b16 %v335
        %v787 = vunpack.c.l.b16 %v336
        %v788 = vunpack.c.l.b16 %v337
        %v789 = vunpack.c.l.b16 %v338
        %v790 = vunpack.c.l.b16 %v339
        %v791 = vunpack.c.l.b16 %v340
        %v792 = vunpack.c.l.b16 %v341
        %v793 = vunpack.c.l.b16 %v342
        %v794 = vunpack.c.l.b16 %v343
        %v795 = vunpack.c.l.b16 %v344
        %v796 = vunpack.c.l.b16 %v345
        %v797 = vunpack.c.l.b16 %v346
        %v798 = vunpack.c.l.b16 %v347
        %v799 = vunpack.c.l.b16 %v348
        %v800 = vunpack.c.l.b16 %v349
        %v801 = vunpack.c.l.b16 %v350
        %v802 = vunpack.c.l.b16 %v351
        %v803 = vunpack.c.l.b16 %v352
        %v804 = vunpack.c.l.b16 %v353
        %v805 = vunpack.c.l.b16 %v354
        %v806 = vunpack.c.l.b16 %v355
        %v807 = vunpack.c.l.b16 %v356
        %v808 = vunpack.c.l.b16 %v357
        %v809 = vunpack.c.l.b16 %v358
        %v810 = vunpack.c.l.b16 %v359
        %v811 = vunpack.c.l.b16 %v360
        %v812 = vunpack.c.l.b16 %v361
        %v813 = vunpack.c.l.b16 %v362
        %v814 = vunpack.c.l.b16 %v363
        %v815 = vunpack.c.l.b16 %v364
        %v816 = vunpack.c.l.b16 %v365
        %v817 = vunpack.c.l.b16 %v366
        %v818 = vunpack.c.l.b16 %v367
        %v819 = vunpack.c.l.b16 %v368
        %v820 = vunpack.c.l.b16 %v369
        %v821 = vunpack.c.l.b16 %v370
        %v822 = vunpack.c.l.b16 %v371
        %v823 = vunpack.c.l.b16 %v372
        %v824 = vunpack.c.l.b16 %v373
        %v825 = vunpack.c.l.b16 %v374
        %v826 = vunpack.c.l.b16 %v375
        %v827 = vunpack.c.l.b16 %v376
        %v828 = vunpack.c.l.b16 %v377
        %v829 = vunpack.c.l.b16 %v378
        %v830 = vunpack.c.l.b16 %v379
        %v831 = vunpack.c.l.b16 %v380
        %v832 = vunpack.c.l.b16 %v381
        %v833 = vunpack.c.l.b16 %v382
        %v834 = vunpack.c.l.b16 %v383
        %v835 = vunpack.c.l.b16 %v384
        %v836 = vunpack.c.l.b16 %v385
        %v837 = vunpack.c.l.b16 %v386
        %v838 = vunpack.c.l.b16 %v387
        %v839 = vunpack.c.l.b16 %v388
        %v840 = vunpack.c.l.b16 %v389
        %v841 = vunpack.c.l.b16 %v390
        %v842 = vunpack.c.l.b16 %v391
        %v843 = vunpack.c.l.b16 %v392
        %v844 = vunpack.c.l.b16 %v393
        %v845 = vunpack.c.l.b16 %v394
        %v846 = vunpack.c.l.b16 %v395
        %v847 = vunpack.c.l.b16 %v396
        %v848 = vunpack.c.l.b16 %v397
        %v849 = vunpack.c.l.b16 %v398
        %v850 = vunpack.c.l.b16 %v399
        %v851 = vunpack.c.l.b16 %v400
        %v852 = vunpack.c.l.b16 %v401
        %v853 = vunpack.c.l.b16 %v402
        %v854 = vunpack.c.l.b16 %v403
        %v855 = vunpack.c.l.b16 %v404
        %v856 = vunpack.c.l.b16 %v405
        %v857 = vunpack.c.l.b16 %v406
        %v858 = vunpack.c.l.b16 %v407
        %v859 = vunpack.c.l.b16 %v408
        %v860 = vunpack.c.l.b16 %v409
        %v861 = vunpack.c.l.b16 %v410
        %v862 = vunpack.c.l.b16 %v411
        %v863 = vunpack.c.l.b16 %v412
        %v864 = vunpack.c.l.b16 %v413
        %v865 = vunpack.c.l.b16 %v414
        %v866 = vunpack.c.l.b16 %v415
        %v867 = vunpack.c.l.b16 %v416
        %v868 = vunpack.c.l.b16 %v417
        %v869 = vunpack.c.l.b16 %v418
        %v870 = vunpack.c.l.b16 %v419
        %v871 = vunpack.c.l.b16 %v420
        %v872 = vunpack.c.l.b16 %v421
        %v873 = vunpack.c.l.b16 %v422
        %v874 = vunpack.c.l.b16 %v423
        %v875 = vunpack.c.l.b16 %v424
        %v876 = vunpack.c.l.b16 %v425
        %v877 = vunpack.c.l.b16 %v426
        %v878 = vunpack.c.l.b16 %v427
        %v879 = vunpack.c.l.b16 %v428
        %v880 = vunpack.c.l.b16 %v429
        %v881 = vunpack.c.l.b16 %v430
        %v882 = vunpack.c.l.b16 %v431
        %v883 = vunpack.c.l.b16 %v432
        %v884 = vunpack.c.l.b16 %v433
        %v885 = vunpack.c.l.b16 %v434
        %v886 = vunpack.c.l.b16 %v435
        %v887 = vunpack.c.l.b16 %v436
        %v888 = vunpack.c.l.b16 %v437
        %v889 = vunpack.c.l.b16 %v438
        %v890 = vunpack.c.l.b16 %v439
        %v891 = vunpack.c.l.b16 %v440
        %v892 = vunpack.c.l.b16 %v441
        %v893 = vunpack.c.l.b16 %v442
        %v894 = vunpack.c.l.b16 %v443
        %v895 = vunpack.c.l.b16 %v444
        %v896 = vunpack.c.l.b16 %v445
        %v897 = vunpack.c.l.b16 %v446
        %v898 = vunpack.c.l.b16 %v447
        %v899 = vunpack.c.l.b16 %v448
        %v900 = vunpack.c.l.b16 %v449
        %v901 = vunpack.c.l.b16 %v450
        %v902 = vunpack.c.l.b16 %v451
        %v903 = vunpack.c.l.b16 %v452
        %v904 = vpack.c.b16 %v713, %v712
        %v905 = vpack.c.b16 %v715, %v714
        %v906 = vpack.c.b16 %v717, %v716
        %v907 = vpack.c.b16 %v719, %v718
        %v908 = vpack.c.b16 %v721, %v720
        %v909 = vpack.c.b16 %v723, %v722
        %v910 = vpack.c.b16 %v725, %v724
        %v911 = vpack.c.b16 %v727, %v726
        %v912 = vpack.c.b16 %v729, %v728
        %v913 = vpack.c.b16 %v731, %v730
        %v914 = vpack.c.b16 %v733, %v732
        %v915 = vpack.c.b16 %v735, %v734
        %v916 = vpack.c.b16 %v737, %v736
        %v917 = vpack.c.b16 %v739, %v738
        %v918 = vpack.c.b16 %v741, %v740
        %v919 = vpack.c.b16 %v743, %v742
        %v920 = vpack.c.b16 %v745, %v744
        %v921 = vpack.c.b16 %v747, %v746
        %v922 = vpack.c.b16 %v749, %v748
        %v923 = vpack.c.b16 %v751, %v750
        %v924 = vpack.c.b16 %v753, %v752
        %v925 = vpack.c.b16 %v755, %v754
        %v926 = vpack.c.b16 %v757, %v756
        %v927 = vpack.c.b16 %v759, %v758
        %v928 = vpack.c.b16 %v761, %v760
        %v929 = vpack.c.b16 %v763, %v762
        %v930 = vpack.c.b16 %v765, %v764
        %v931 = vpack.c.b16 %v767, %v766
        %v932 = vpack.c.b16 %v769, %v768
        %v933 = vpack.c.b16 %v771, %v770
        %v934 = vpack.c.b16 %v773, %v772
        %v935 = vpack.c.b16 %v775, %v774
        %v936 = vpack.c.b16 %v777, %v776
        %v937 = vpack.c.b16 %v779, %v778
        %v938 = vpack.c.b16 %v781, %v780
        %v939 = vpack.c.b16 %v783, %v782
        %v940 = vpack.c.b16 %v785, %v784
        %v941 = vpack.c.b16 %v787, %v786
        %v942 = vpack.c.b16 %v789, %v788
        %v943 = vpack.c.b16 %v791, %v790
        %v944 = vpack.c.b16 %v793, %v792
        %v945 = vpack.c.b16 %v795, %v794
        %v946 = vpack.c.b16 %v797, %v796
        %v947 = vpack.c.b16 %v799, %v798
        %v948 = vpack.c.b16 %v801, %v800
        %v949 = vpack.c.b16 %v803, %v802
        %v950 = vpack.c.b16 %v805, %v804
        %v951 = vpack.c.b16 %v807, %v806
        %v952 = vpack.c.b16 %v809, %v808
        %v953 = vpack.c.b16 %v811, %v810
        %v954 = vpack.c.b16 %v813, %v812
        %v955 = vpack.c.b16 %v815, %v814
        %v956 = vpack.c.b16 %v817, %v816
        %v957 = vpack.c.b16 %v819, %v818
        %v958 = vpack.c.b16 %v821, %v820
        %v959 = vpack.c.b16 %v823, %v822
        %v960 = vpack.c.b16 %v825, %v824
        %v961 = vpack.c.b16 %v827, %v826
        %v962 = vpack.c.b16 %v829, %v828
        %v963 = vpack.c.b16 %v831, %v830
        %v964 = vpack.c.b16 %v833, %v832
        %v965 = vpack.c.b16 %v835, %v834
        %v966 = vpack.c.b16 %v837, %v836
        %v967 = vpack.c.b16 %v839, %v838
        %v968 = vpack.c.b16 %v841, %v840
        %v969 = vpack.c.b16 %v843, %v842
        %v970 = vpack.c.b16 %v845, %v844
        %v971 = vpack.c.b16 %v847, %v846
        %v972 = vpack.c.b16 %v849, %v848
        %v973 = vpack.c.b16 %v851, %v850
        %v974 = vpack.c.b16 %v853, %v852
        %v975 = vpack.c.b16 %v855, %v854
        %v976 = vpack.c.b16 %v857, %v856
        %v977 = vpack.c.b16 %v859, %v858
        %v978 = vpack.c.b16 %v861, %v860
        %v979 = vpack.c.b16 %v863, %v862
        %v980 = vpack.c.b16 %v865, %v864
        %v981 = vpack.c.b16 %v867, %v866
        %v982 = vpack.c.b16 %v869, %v868
        %v983 = vpack.c.b16 %v871, %v870
        %v984 = vpack.c.b16 %v873, %v872
        %v985 = vpack.c.b16 %v875, %v874
        %v986 = vpack.c.b16 %v877, %v876
        %v987 = vpack.c.b16 %v879, %v878
        %v988 = vpack.c.b16 %v881, %v880
        %v989 = vpack.c.b16 %v883, %v882
        %v990 = vpack.c.b16 %v885, %v884
        %v991 = vpack.c.b16 %v887, %v886
        %v992 = vpack.c.b16 %v889, %v888
        %v993 = vpack.c.b16 %v891, %v890
        %v994 = vpack.c.b16 %v893, %v892
        %v995 = vpack.c.b16 %v895, %v894
        %v996 = vpack.c.b16 %v897, %v896
        %v997 = vpack.c.b16 %v899, %v898
        %v998 = vpack.c.b16 %v901, %v900
        %v999 = vpack.c.b16 %v903, %v902
        %1096 = vmatprep.subr.bf16.mxu0 0
        %1097 = vmatpush1.bf16.msra.mxu0 %v904
        %1098 = vmatprep.subr.bf16.mxu0 0
        %1099 = vmatpush1.bf16.msra.mxu0 %v905
        %1100 = vmatprep.subr.bf16.mxu0 0
        %1101 = vmatpush1.bf16.msra.mxu0 %v906
        %1102 = vmatprep.subr.bf16.mxu0 0
        %1103 = vmatpush1.bf16.msra.mxu0 %v907
        %1104 = vmatprep.subr.bf16.mxu0 0
        %1105 = vmatpush1.bf16.msra.mxu0 %v908
        %1106 = vmatprep.subr.bf16.mxu0 0
        %1107 = vmatpush1.bf16.msra.mxu0 %v909
        %1108 = vmatprep.subr.bf16.mxu0 0
        %1109 = vmatpush1.bf16.msra.mxu0 %v910
        %1110 = vmatprep.subr.bf16.mxu0 0
        %1111 = vmatpush1.bf16.msra.mxu0 %v911
        %1112 = vmatprep.subr.bf16.mxu0 0
        %1113 = vmatpush1.bf16.msra.mxu0 %v912
        %1114 = vmatprep.subr.bf16.mxu0 0
        %1115 = vmatpush1.bf16.msra.mxu0 %v913
        %1116 = vmatprep.subr.bf16.mxu0 0
        %1117 = vmatpush1.bf16.msra.mxu0 %v914
        %1118 = vmatprep.subr.bf16.mxu0 0
        %1119 = vmatpush1.bf16.msra.mxu0 %v915
        %1120 = vmatprep.subr.bf16.mxu0 0
        %1121 = vmatpush1.bf16.msra.mxu0 %v916
        %1122 = vmatprep.subr.bf16.mxu0 0
        %1123 = vmatpush1.bf16.msra.mxu0 %v917
        %1124 = vmatprep.subr.bf16.mxu0 0
        %1125 = vmatpush1.bf16.msra.mxu0 %v918
        %1126 = vmatprep.subr.bf16.mxu0 0
        %1127 = vmatpush1.bf16.msra.mxu0 %v919
        %1128 = vmatprep.mubr.bf16.mxu0 %v497
        %1129 = vmatmul.mubr.bf16.gmra.mrb[0].mxu0 %v496
        %v1130 = vpop.f32.mrb[0].mxu0
        %v1131 = vadd.f32 %v458, %v1130
        %v1132 = vpop.f32.mrb[0].mxu0
        %v1133 = vpop.f32.mrb[0].mxu0
        %v1134 = vadd.f32 %v458, %v1133
        %v1135 = vpop.f32.mrb[0].mxu0
        %1136 = vdwg.mxu0
        %1137 = vmatprep.subr.bf16.mxu0 0
        %1138 = vmatpush1.bf16.msra.mxu0 %v920
        %1139 = vmatprep.subr.bf16.mxu0 0
        %1140 = vmatpush1.bf16.msra.mxu0 %v921
        %1141 = vmatprep.subr.bf16.mxu0 0
        %1142 = vmatpush1.bf16.msra.mxu0 %v922
        %1143 = vmatprep.subr.bf16.mxu0 0
        %1144 = vmatpush1.bf16.msra.mxu0 %v923
        %1145 = vmatprep.subr.bf16.mxu0 0
        %1146 = vmatpush1.bf16.msra.mxu0 %v924
        %1147 = vmatprep.subr.bf16.mxu0 0
        %1148 = vmatpush1.bf16.msra.mxu0 %v925
        %1149 = vmatprep.subr.bf16.mxu0 0
        %1150 = vmatpush1.bf16.msra.mxu0 %v926
        %1151 = vmatprep.subr.bf16.mxu0 0
        %1152 = vmatpush1.bf16.msra.mxu0 %v927
        %1153 = vmatprep.subr.bf16.mxu0 0
        %1154 = vmatpush1.bf16.msra.mxu0 %v928
        %1155 = vmatprep.subr.bf16.mxu0 0
        %1156 = vmatpush1.bf16.msra.mxu0 %v929
        %1157 = vmatprep.subr.bf16.mxu0 0
        %1158 = vmatpush1.bf16.msra.mxu0 %v930
        %1159 = vmatprep.subr.bf16.mxu0 0
        %1160 = vmatpush1.bf16.msra.mxu0 %v931
        %1161 = vmatprep.subr.bf16.mxu0 0
        %1162 = vmatpush1.bf16.msra.mxu0 %v932
        %1163 = vmatprep.subr.bf16.mxu0 0
        %1164 = vmatpush1.bf16.msra.mxu0 %v933
        %1165 = vmatprep.subr.bf16.mxu0 0
        %1166 = vmatpush1.bf16.msra.mxu0 %v934
        %1167 = vmatprep.subr.bf16.mxu0 0
        %1168 = vmatpush1.bf16.msra.mxu0 %v935
        %1169 = vmatprep.mubr.bf16.mxu0 %v499
        %1170 = vmatmul.mubr.bf16.gmra.mrb[0].mxu0 %v498
        %v1171 = vpop.f32.mrb[0].mxu0
        %v1172 = vadd.f32 %v1131, %v1171
        %v1173 = vpop.f32.mrb[0].mxu0
        %v1174 = vpop.f32.mrb[0].mxu0
        %v1175 = vadd.f32 %v1134, %v1174
        %v1176 = vpop.f32.mrb[0].mxu0
        %1177 = vdwg.mxu0
        %1178 = vmatprep.subr.bf16.mxu0 0
        %1179 = vmatpush1.bf16.msra.mxu0 %v936
        %1180 = vmatprep.subr.bf16.mxu0 0
        %1181 = vmatpush1.bf16.msra.mxu0 %v937
        %1182 = vmatprep.subr.bf16.mxu0 0
        %1183 = vmatpush1.bf16.msra.mxu0 %v938
        %1184 = vmatprep.subr.bf16.mxu0 0
        %1185 = vmatpush1.bf16.msra.mxu0 %v939
        %1186 = vmatprep.subr.bf16.mxu0 0
        %1187 = vmatpush1.bf16.msra.mxu0 %v940
        %1188 = vmatprep.subr.bf16.mxu0 0
        %1189 = vmatpush1.bf16.msra.mxu0 %v941
        %1190 = vmatprep.subr.bf16.mxu0 0
        %1191 = vmatpush1.bf16.msra.mxu0 %v942
        %1192 = vmatprep.subr.bf16.mxu0 0
        %1193 = vmatpush1.bf16.msra.mxu0 %v943
        %1194 = vmatprep.subr.bf16.mxu0 0
        %1195 = vmatpush1.bf16.msra.mxu0 %v944
        %1196 = vmatprep.subr.bf16.mxu0 0
        %1197 = vmatpush1.bf16.msra.mxu0 %v945
        %1198 = vmatprep.subr.bf16.mxu0 0
        %1199 = vmatpush1.bf16.msra.mxu0 %v946
        %1200 = vmatprep.subr.bf16.mxu0 0
        %1201 = vmatpush1.bf16.msra.mxu0 %v947
        %1202 = vmatprep.subr.bf16.mxu0 0
        %1203 = vmatpush1.bf16.msra.mxu0 %v948
        %1204 = vmatprep.subr.bf16.mxu0 0
        %1205 = vmatpush1.bf16.msra.mxu0 %v949
        %1206 = vmatprep.subr.bf16.mxu0 0
        %1207 = vmatpush1.bf16.msra.mxu0 %v950
        %1208 = vmatprep.subr.bf16.mxu0 0
        %1209 = vmatpush1.bf16.msra.mxu0 %v951
        %1210 = vmatprep.mubr.bf16.mxu0 %v501
        %1211 = vmatmul.mubr.bf16.gmra.mrb[0].mxu0 %v500
        %v1212 = vpop.f32.mrb[0].mxu0
        %v1213 = vadd.f32 %v1172, %v1212
        %v1214 = vpop.f32.mrb[0].mxu0
        %v1215 = vpop.f32.mrb[0].mxu0
        %v1216 = vadd.f32 %v1175, %v1215
        %v1217 = vpop.f32.mrb[0].mxu0
        %1218 = vdwg.mxu0
        %1219 = vmatprep.subr.bf16.mxu0 0
        %1220 = vmatpush1.bf16.msra.mxu0 %v952
        %1221 = vmatprep.subr.bf16.mxu0 0
        %1222 = vmatpush1.bf16.msra.mxu0 %v953
        %1223 = vmatprep.subr.bf16.mxu0 0
        %1224 = vmatpush1.bf16.msra.mxu0 %v954
        %1225 = vmatprep.subr.bf16.mxu0 0
        %1226 = vmatpush1.bf16.msra.mxu0 %v955
        %1227 = vmatprep.subr.bf16.mxu0 0
        %1228 = vmatpush1.bf16.msra.mxu0 %v956
        %1229 = vmatprep.subr.bf16.mxu0 0
        %1230 = vmatpush1.bf16.msra.mxu0 %v957
        %1231 = vmatprep.subr.bf16.mxu0 0
        %1232 = vmatpush1.bf16.msra.mxu0 %v958
        %1233 = vmatprep.subr.bf16.mxu0 0
        %1234 = vmatpush1.bf16.msra.mxu0 %v959
        %1235 = vmatprep.subr.bf16.mxu0 0
        %1236 = vmatpush1.bf16.msra.mxu0 %v960
        %1237 = vmatprep.subr.bf16.mxu0 0
        %1238 = vmatpush1.bf16.msra.mxu0 %v961
        %1239 = vmatprep.subr.bf16.mxu0 0
        %1240 = vmatpush1.bf16.msra.mxu0 %v962
        %1241 = vmatprep.subr.bf16.mxu0 0
        %1242 = vmatpush1.bf16.msra.mxu0 %v963
        %1243 = vmatprep.subr.bf16.mxu0 0
        %1244 = vmatpush1.bf16.msra.mxu0 %v964
        %1245 = vmatprep.subr.bf16.mxu0 0
        %1246 = vmatpush1.bf16.msra.mxu0 %v965
        %1247 = vmatprep.subr.bf16.mxu0 0
        %1248 = vmatpush1.bf16.msra.mxu0 %v966
        %1249 = vmatprep.subr.bf16.mxu0 0
        %1250 = vmatpush1.bf16.msra.mxu0 %v967
        %1251 = vmatprep.mubr.bf16.mxu0 %v503
        %1252 = vmatmul.mubr.bf16.gmra.mrb[0].mxu0 %v502
        %v1253 = vpop.f32.mrb[0].mxu0
        %v1254 = vadd.f32 %v1213, %v1253
        %v1255 = vpop.f32.mrb[0].mxu0
        %v1256 = vpop.f32.mrb[0].mxu0
        %v1257 = vadd.f32 %v1216, %v1256
        %v1258 = vpop.f32.mrb[0].mxu0
        %1259 = vdwg.mxu0
        %1260 = vmatprep.subr.bf16.mxu0 0
        %1261 = vmatpush1.bf16.msra.mxu0 %v968
        %1262 = vmatprep.subr.bf16.mxu0 0
        %1263 = vmatpush1.bf16.msra.mxu0 %v969
        %1264 = vmatprep.subr.bf16.mxu0 0
        %1265 = vmatpush1.bf16.msra.mxu0 %v970
        %1266 = vmatprep.subr.bf16.mxu0 0
        %1267 = vmatpush1.bf16.msra.mxu0 %v971
        %1268 = vmatprep.subr.bf16.mxu0 0
        %1269 = vmatpush1.bf16.msra.mxu0 %v972
        %1270 = vmatprep.subr.bf16.mxu0 0
        %1271 = vmatpush1.bf16.msra.mxu0 %v973
        %1272 = vmatprep.subr.bf16.mxu0 0
        %1273 = vmatpush1.bf16.msra.mxu0 %v974
        %1274 = vmatprep.subr.bf16.mxu0 0
        %1275 = vmatpush1.bf16.msra.mxu0 %v975
        %1276 = vmatprep.subr.bf16.mxu0 0
        %1277 = vmatpush1.bf16.msra.mxu0 %v976
        %1278 = vmatprep.subr.bf16.mxu0 0
        %1279 = vmatpush1.bf16.msra.mxu0 %v977
        %1280 = vmatprep.subr.bf16.mxu0 0
        %1281 = vmatpush1.bf16.msra.mxu0 %v978
        %1282 = vmatprep.subr.bf16.mxu0 0
        %1283 = vmatpush1.bf16.msra.mxu0 %v979
        %1284 = vmatprep.subr.bf16.mxu0 0
        %1285 = vmatpush1.bf16.msra.mxu0 %v980
        %1286 = vmatprep.subr.bf16.mxu0 0
        %1287 = vmatpush1.bf16.msra.mxu0 %v981
        %1288 = vmatprep.subr.bf16.mxu0 0
        %1289 = vmatpush1.bf16.msra.mxu0 %v982
        %1290 = vmatprep.subr.bf16.mxu0 0
        %1291 = vmatpush1.bf16.msra.mxu0 %v983
        %1292 = vmatprep.mubr.bf16.mxu0 %v505
        %1293 = vmatmul.mubr.bf16.gmra.mrb[0].mxu0 %v504
        %v1294 = vpop.f32.mrb[0].mxu0
        %v1295 = vadd.f32 %v1254, %v1294
        %v1296 = vpop.f32.mrb[0].mxu0
        %v1297 = vpop.f32.mrb[0].mxu0
        %v1298 = vadd.f32 %v1257, %v1297
        %v1299 = vpop.f32.mrb[0].mxu0
        %1300 = vdwg.mxu0
        %1301 = vmatprep.subr.bf16.mxu0 0
        %1302 = vmatpush1.bf16.msra.mxu0 %v984
        %1303 = vmatprep.subr.bf16.mxu0 0
        %1304 = vmatpush1.bf16.msra.mxu0 %v985
        %1305 = vmatprep.subr.bf16.mxu0 0
        %1306 = vmatpush1.bf16.msra.mxu0 %v986
        %1307 = vmatprep.subr.bf16.mxu0 0
        %1308 = vmatpush1.bf16.msra.mxu0 %v987
        %1309 = vmatprep.subr.bf16.mxu0 0
        %1310 = vmatpush1.bf16.msra.mxu0 %v988
        %1311 = vmatprep.subr.bf16.mxu0 0
        %1312 = vmatpush1.bf16.msra.mxu0 %v989
        %1313 = vmatprep.subr.bf16.mxu0 0
        %1314 = vmatpush1.bf16.msra.mxu0 %v990
        %1315 = vmatprep.subr.bf16.mxu0 0
        %1316 = vmatpush1.bf16.msra.mxu0 %v991
        %1317 = vmatprep.subr.bf16.mxu0 0
        %1318 = vmatpush1.bf16.msra.mxu0 %v992
        %1319 = vmatprep.subr.bf16.mxu0 0
        %1320 = vmatpush1.bf16.msra.mxu0 %v993
        %1321 = vmatprep.subr.bf16.mxu0 0
        %1322 = vmatpush1.bf16.msra.mxu0 %v994
        %1323 = vmatprep.subr.bf16.mxu0 0
        %1324 = vmatpush1.bf16.msra.mxu0 %v995
        %1325 = vmatprep.subr.bf16.mxu0 0
        %1326 = vmatpush1.bf16.msra.mxu0 %v996
        %1327 = vmatprep.subr.bf16.mxu0 0
        %1328 = vmatpush1.bf16.msra.mxu0 %v997
        %1329 = vmatprep.subr.bf16.mxu0 0
        %1330 = vmatpush1.bf16.msra.mxu0 %v998
        %1331 = vmatprep.subr.bf16.mxu0 0
        %1332 = vmatpush1.bf16.msra.mxu0 %v999
        %1333 = vmatprep.mubr.bf16.mxu0 %v507
        %1334 = vmatmul.mubr.bf16.gmra.mrb[0].mxu0 %v506
        %v1335 = vpop.f32.mrb[0].mxu0
        %v1336 = vadd.f32 %v1295, %v1335
        %v1337 = vpop.f32.mrb[0].mxu0
        %v1338 = vpop.f32.mrb[0].mxu0
        %v1339 = vadd.f32 %v1298, %v1338
        %v1340 = vpop.f32.mrb[0].mxu0
        %1341 = vdwg.mxu0
        %v1342 = vmul.f32 %v1336, %v1336
        %v1343 = vmul.f32 %v1339, %v1339
        %v1344 = vld [vmem:[#allocation7] sm:$0xff]
        %v1345 = vld [vmem:[#allocation7 + $0x8] sm:$0xff]
        %v1346 = vld [vmem:[#allocation7 + $0x10] sm:$0xff]
        %v1347 = vld [vmem:[#allocation7 + $0x18] sm:$0xff]
        %v1348 = vld [vmem:[#allocation7 + $0x20] sm:$0xff]
        %v1349 = vld [vmem:[#allocation7 + $0x28] sm:$0xff]
        %v1350 = vld [vmem:[#allocation7 + $0x30] sm:$0xff]
        %v1351 = vld [vmem:[#allocation7 + $0x38] sm:$0xff]
        %v1352 = vld [vmem:[#allocation7 + $0x40] sm:$0xff]
        %v1353 = vld [vmem:[#allocation7 + $0x48] sm:$0xff]
        %v1354 = vld [vmem:[#allocation7 + $0x50] sm:$0xff]
        %v1355 = vld [vmem:[#allocation7 + $0x58] sm:$0xff]
        %v1356 = vld [vmem:[#allocation7 + $0x60] sm:$0xff]
        %v1357 = vld [vmem:[#allocation7 + $0x68] sm:$0xff]
        %v1358 = vld [vmem:[#allocation7 + $0x70] sm:$0xff]
        %v1359 = vld [vmem:[#allocation7 + $0x78] sm:$0xff]
        %1360 = vmatprep.subr.mxu0 0.0
        %1361 = vmatpush1.msra.mxu0 %v1344
        %1362 = vmatprep.subr.mxu0 0.0
        %1363 = vmatpush1.msra.mxu0 %v1345
        %1364 = vmatprep.subr.mxu0 0.0
        %1365 = vmatpush1.msra.mxu0 %v1346
        %1366 = vmatprep.subr.mxu0 0.0
        %1367 = vmatpush1.msra.mxu0 %v1347
        %1368 = vmatprep.subr.mxu0 0.0
        %1369 = vmatpush1.msra.mxu0 %v1348
        %1370 = vmatprep.subr.mxu0 0.0
        %1371 = vmatpush1.msra.mxu0 %v1349
        %1372 = vmatprep.subr.mxu0 0.0
        %1373 = vmatpush1.msra.mxu0 %v1350
        %1374 = vmatprep.subr.mxu0 0.0
        %1375 = vmatpush1.msra.mxu0 %v1351
        %1376 = vmatprep.subr.mxu0 0.0
        %1377 = vmatpush1.msra.mxu0 %v1352
        %1378 = vmatprep.subr.mxu0 0.0
        %1379 = vmatpush1.msra.mxu0 %v1353
        %1380 = vmatprep.subr.mxu0 0.0
        %1381 = vmatpush1.msra.mxu0 %v1354
        %1382 = vmatprep.subr.mxu0 0.0
        %1383 = vmatpush1.msra.mxu0 %v1355
        %1384 = vmatprep.subr.mxu0 0.0
        %1385 = vmatpush1.msra.mxu0 %v1356
        %1386 = vmatprep.subr.mxu0 0.0
        %1387 = vmatpush1.msra.mxu0 %v1357
        %1388 = vmatprep.subr.mxu0 0.0
        %1389 = vmatpush1.msra.mxu0 %v1358
        %1390 = vmatprep.subr.mxu0 0.0
        %1391 = vmatpush1.msra.mxu0 %v1359
        %1392 = vmatprep.subr.mxu0 0.0
        %1393 = vmatpush1.msra.mxu0 0.0
        %1394 = vmatprep.subr.mxu0 0.0
        %1395 = vmatpush1.msra.mxu0 0.0
        %1396 = vmatprep.subr.mxu0 0.0
        %1397 = vmatpush1.msra.mxu0 0.0
        %1398 = vmatprep.subr.mxu0 0.0
        %1399 = vmatpush1.msra.mxu0 0.0
        %1400 = vmatprep.subr.mxu0 0.0
        %1401 = vmatpush1.msra.mxu0 0.0
        %1402 = vmatprep.subr.mxu0 0.0
        %1403 = vmatpush1.msra.mxu0 0.0
        %1404 = vmatprep.subr.mxu0 0.0
        %1405 = vmatpush1.msra.mxu0 0.0
        %1406 = vmatprep.subr.mxu0 0.0
        %1407 = vmatpush1.msra.mxu0 0.0
        %1408 = vmatprep.subr.mxu0 0.0
        %1409 = vmatpush1.msra.mxu0 0.0
        %1410 = vmatprep.subr.mxu0 0.0
        %1411 = vmatpush1.msra.mxu0 0.0
        %1412 = vmatprep.subr.mxu0 0.0
        %1413 = vmatpush1.msra.mxu0 0.0
        %1414 = vmatprep.subr.mxu0 0.0
        %1415 = vmatpush1.msra.mxu0 0.0
        %1416 = vmatprep.subr.mxu0 0.0
        %1417 = vmatpush1.msra.mxu0 0.0
        %1418 = vmatprep.subr.mxu0 0.0
        %1419 = vmatpush1.msra.mxu0 0.0
        %1420 = vmatprep.subr.mxu0 0.0
        %1421 = vmatpush1.msra.mxu0 0.0
        %1422 = vmatprep.subr.mxu0 0.0
        %1423 = vmatpush1.msra.mxu0 0.0
        %1424 = vmatprep.mubr.f32.mxu0 0.0
        %1425 = vmatmul.mubr.f32.gmra.mrb[0].mxu0 %v1342
        %v1426 = vpop.f32.mrb[0].mxu0
        %v1427 = vadd.f32 0.0, %v1426
        %v1428 = vpop.f32.mrb[0].mxu0
        %1429 = vmatprep.mubr.f32.mxu0 0.0
        %1430 = vmatmul.mubr.f32.gmra.mrb[0].mxu0 %v1343
        %v1431 = vpop.f32.mrb[0].mxu0
        %v1432 = vadd.f32 0.0, %v1431
        %v1433 = vpop.f32.mrb[0].mxu0
        %1434 = vdwg.mxu0
        %v1435 = vrsqrt.pop %v1427
        %v1436 = vmul.f32 %v1427, %v1435
        %vm1437 = vcmp.eq.f32.partialorder %v1427, inf
        %v1438 = vsel %vm1437, %v1427, %v1436
        %vm1439 = vcmp.eq.f32.partialorder %v1427, 0.0
        %v1440 = vand.u32 %v1427, 2147483648
        %v1441 = vsel %vm1439, %v1440, %v1438
        %v1442 = vrsqrt.pop %v1432
        %v1443 = vmul.f32 %v1432, %v1442
        %vm1444 = vcmp.eq.f32.partialorder %v1432, inf
        %v1445 = vsel %vm1444, %v1432, %v1443
        %vm1446 = vcmp.eq.f32.partialorder %v1432, 0.0
        %v1447 = vand.u32 %v1432, 2147483648
        %v1448 = vsel %vm1446, %v1447, %v1445
        %v1449 = vmul.f32 %v1336, %v1441
        %v1450 = vmul.f32 %v1339, %v1448
        %v1451 = vadd.f32 %v1427, 1.0
        %v1452 = vadd.f32 %v1432, 1.0
        %v1453 = vrcp.pop %v1451
        %v1454 = vrcp.pop %v1452
        %v1455 = vmul.f32 %v1449, %v1453
        %v1456 = vmul.f32 %v1450, %v1454
        %1457 = vst [vmem:[%s245] sm:$0xff] %v1455
        %1458 = vst [vmem:[%s245 + $0x8] sm:$0xff] %v1456
        %s1459 = sand.u32 %s119, 1
        %s1460 = scalar_lea.sflag [#allocation4], %s1459
        %s1461 = sand.u32 %s119, 1
        %s1462 = smul.addr %s1461, 16
        %s1463 = scalar_lea.vmem [#allocation8], %s1462
        // Predicated region
        $region49: #{tpu_custom_call.1} parent=35 // pred_check
          %p1464 = pneg %p129
        $region50: #{tpu_custom_call.1} parent=35 // pred_check_branch
          %1466 = sbr.rel (%p1464) target = $region52
        $region51: #{tpu_custom_call.1} parent=35 // pred_region
          %s1467 = smul.u32 2, %s22
          %s1469 = ssub.s32 256, 256
          %1470 = vsyncadd %s1460, %s1469
          %s1471 = smul.addr %s1467, 128
          %s1472 = scalar_lea.hbm %s4, %s1471
          %s1473 = sshll.u32 %s1463, 4
          %s1474 = int_to_ptr.vmem [resolvable:$true] %s1473
          %1479 = dma.vmem_to_hbm [thread:$0]  %s1474, 256, %s1472, %s1460, 128, 128, 8
        $region52: #{tpu_custom_call.1} parent=35 // pred_fallthru
          _
      $region36: #{tpu_custom_call.1} parent=5 // pred_fallthru
        _
      %p1480 = scmp.le.s32.totalorder 2, %s17
      // Predicated region
      $region53: #{tpu_custom_call.1} parent=5 // pred_check
        %p1481 = pneg %p1480
      $region54: #{tpu_custom_call.1} parent=5 // pred_check_branch
        %1483 = sbr.rel (%p1481) target = $region56
      $region55: #{tpu_custom_call.1} parent=5 // pred_region
        %s1484 = ssub.s32 %s17, 2
        // Predicated region
        $region57: #{tpu_custom_call.1} parent=55 // pred_check
          %p1485 = pneg %p135
        $region58: #{tpu_custom_call.1} parent=55 // pred_check_branch
          %1487 = sbr.rel (%p1485) target = $region60
        $region59: #{tpu_custom_call.1} parent=55 // pred_region
          %s1488 = sand.u32 %s120, 1
          %s1489 = scalar_lea.sflag [#allocation4], %s1488
          %s1490 = sand.u32 %s120, 1
          %s1491 = smul.addr %s1490, 16
          %s1492 = scalar_lea.vmem [#allocation8], %s1491
          %1493 = dma.done %s1489, 256
        $region60: #{tpu_custom_call.1} parent=55 // pred_fallthru
          _
      $region56: #{tpu_custom_call.1} parent=5 // pred_fallthru
        _
    $region6: #{tpu_custom_call.1} parent=1 // loop_footer
      %s21 = sadd.s32 1, %s17
    $region7: #{tpu_custom_call.1} parent=1 // loop_footer_branch
      %16 = sbr.rel target = $region3
    $region8: #{tpu_custom_call.1} parent=1 // loop_exit
      _
    %1494 = vsyncpa [#allocation3], 1
    %s1495 = scalar_lea.sflag [#allocation3], 1
    %1496 = vsyncpa %s1495, 1
    %1497 = vsyncpa [#allocation6], 1
    %1498 = vsyncpa [#allocation4], 1
    %s1499 = scalar_lea.sflag [#allocation4], 1
    %1500 = vsyncpa %s1499, 1

</llo_original>
